<compile_context>
chip_gen: v5e
topology: v5e:2x2
jax: 0.10.0
libtpu: 0.0.40
codegen_flags: <defaults>
</compile_context>

<pallas_src>
import functools

import jax
import jax.numpy as jnp
from jax import lax
from jax.experimental import pallas as pl
from jax.experimental.pallas import tpu as pltpu


# -----------------------------------------------------------------------------
# Fused decoder kernel (one batch element per grid step).
#
#   x1_ref : (1, H, WP, Cin)            x1 with 1 zero col on the left, zero-padded
#                                       on the right up to WP = WIN+1 columns
#   x2_ref : (1, H+1, 2, W+1, 2*C2)     zero-padded skip input in sub-pixel layout:
#                                       [p, rho, k, b*C2+ch] = x2_pad[2p+rho, 2k+b, ch]
#   w4_ref : (2, 2, Cin, Cout)          w_up[ic, oc, a, b] -> [a, b, ic, oc]
#   bup_ref: (1, 1, Cout)
#   wc_ref : (2, 12*Cmid, Cout)         3x3 conv weights repacked per output col-parity
#   bc_ref : (1, Cout)
#   o_ref  : (1, H, 2, W, 2*Cout)       [i, alpha, j, beta*Cout+oc] = out[2i+a, 2j+b, oc]
#   pu_ref : (H+1, 2, WIN, 2*Cout)      VMEM scratch: padded up-image, sub-pixel packed
# -----------------------------------------------------------------------------
def _decoder_kernel(x1_ref, x2_ref, w4_ref, bup_ref, wc_ref, bc_ref, o_ref, pu_ref,
                    *, H, W, WIN, Cout, C2):
    f32 = jnp.float32

    # ---------------- ConvTranspose2d(k=2, s=2) -> padded sub-pixel scratch ------
    # inL[i, c] = x1[i, c-1] (zero at c=0);  inR[i, c] = x1[i, c] (zero for c >= W)
    inL = x1_ref[0, :, 0:WIN, :].reshape(H * WIN, -1)
    inR = x1_ref[0, :, 1:WIN + 1, :].reshape(H * WIN, -1)

    cidx = lax.broadcasted_iota(jnp.int32, (1, WIN, 1), 1)
    bup = bup_ref[...]                                   # (1, 1, Cout)

    zrow = jnp.zeros((WIN, 2 * Cout), f32)
    pu_ref[0, 0] = zrow                                  # top SAME-padding row
    pu_ref[H, 1] = zrow                                  # bottom SAME-padding row

    for a in (0, 1):
        # m0: even padded columns 2k  (= b=1 sub-image shifted right by one pair)
        # m1: odd  padded columns 2k+1 (= b=0 sub-image)
        m0 = jnp.dot(inL, w4_ref[a, 1],
                     preferred_element_type=f32).reshape(H, WIN, Cout)
        m1 = jnp.dot(inR, w4_ref[a, 0],
                     preferred_element_type=f32).reshape(H, WIN, Cout)
        # add bias only on real (non-padding) columns, force padding columns to 0
        m0 = jnp.where((cidx >= 1) & (cidx <= W), m0 + bup, 0.0)
        m1 = jnp.where(cidx <= W - 1, m1 + bup, 0.0)
        slab = jnp.concatenate([m0, m1], axis=-1)        # (H, WIN, 2*Cout)
        if a == 0:
            pu_ref[0:H, 1] = slab                        # padded rows 2i+1
        else:
            pu_ref[1:H + 1, 0] = slab                    # padded rows 2i+2

    # ---------------- channel concat + 3x3 conv + ReLU (sub-pixel im2col dot) ----
    bc = bc_ref[...]                                     # (1, Cout)
    for alpha in (0, 1):
        halves = []
        for beta in (0, 1):
            up_pieces, x2_pieces = [], []
            for dy in range(3):
                c0 = (alpha + dy) // 2                   # padded row 2i+alpha+dy
                rho = (alpha + dy) % 2
                for d0 in (0, 1):                        # column pair j + d0
                    su = pu_ref[c0:c0 + H, rho, d0:d0 + W, :]        # (H, W, 2*Cout)
                    sx = x2_ref[0, c0:c0 + H, rho, d0:d0 + W, :]     # (H, W, 2*C2)
                    up_pieces.append(su.reshape(H * W, 2 * Cout))
                    x2_pieces.append(sx.reshape(H * W, 2 * C2))
            cols = jnp.concatenate(up_pieces + x2_pieces, axis=-1)   # (H*W, 12*Cmid)
            acc = jnp.dot(cols, wc_ref[beta], preferred_element_type=f32) + bc
            halves.append(jnp.maximum(acc, 0.0).reshape(H, W, Cout))
        o_ref[0, :, alpha, :, :] = jnp.concatenate(halves, axis=-1).astype(o_ref.dtype)


# -----------------------------------------------------------------------------
# Wrapper: full Decoder forward.  Inputs / outputs are NCHW (PyTorch layout).
# -----------------------------------------------------------------------------
def decoder_forward(x1_nchw, x2_nchw, params):
    w_up, b_up = params["w_up"], params["b_up"]          # (Cin, Cout, 2, 2), (Cout,)
    w_c, b_c = params["w_conv"], params["b_conv"]        # (Cout, Cmid, 3, 3), (Cout,)

    N, Cin, H, W = x1_nchw.shape
    Cout = b_up.shape[0]
    C2 = x2_nchw.shape[1]
    Cmid = Cout + C2
    assert w_c.shape[1] == Cmid
    Ho, Wo = 2 * H, 2 * W

    WIN = ((W + 1 + 7) // 8) * 8                         # 8-aligned width >= W+1
    WP = WIN + 1
    f32 = jnp.float32

    # ---- inputs in kernel-friendly layouts (one pass per tensor, rest is free) --
    x1_nhwc = jnp.transpose(x1_nchw, (0, 2, 3, 1)).astype(f32)            # (N,H,W,Cin)
    x1p = jnp.pad(x1_nhwc, ((0, 0), (0, 0), (1, WP - 1 - W), (0, 0)))     # (N,H,WP,Cin)

    x2_nhwc = jnp.transpose(x2_nchw, (0, 2, 3, 1)).astype(f32)            # (N,Ho,Wo,C2)
    x2_pad = jnp.pad(x2_nhwc, ((0, 0), (1, 1), (1, 1), (0, 0)))           # (N,Ho+2,Wo+2,C2)
    x2p = x2_pad.reshape(N, H + 1, 2, W + 1, 2 * C2)                      # pure reshape

    w4 = jnp.transpose(w_up, (2, 3, 0, 1)).astype(f32)                    # (2,2,Cin,Cout)
    bup3 = b_up.reshape(1, 1, Cout).astype(f32)
    bc2 = b_c.reshape(1, Cout).astype(f32)

    # ---- repack 3x3 conv weights for the sub-pixel im2col dot -------------------
    # kernel K-layout: [ up slabs (dy, d0; lanes m*Cout+oc) | x2 slabs (dy, d0; m*C2+ch) ]
    w_hwio = jnp.transpose(w_c, (2, 3, 1, 0)).astype(f32)                 # (3,3,Cmid,Cout)
    wcat = []
    for beta in range(2):
        blocks_up, blocks_x2 = [], []
        for dy in range(3):
            for d0 in range(2):
                for m in range(2):
                    dx = 2 * d0 + m - beta
                    if 0 <= dx <= 2:
                        blocks_up.append(w_hwio[dy, dx, 0:Cout, :])
                        blocks_x2.append(w_hwio[dy, dx, Cout:Cmid, :])
                    else:
                        blocks_up.append(jnp.zeros((Cout, Cout), f32))
                        blocks_x2.append(jnp.zeros((C2, Cout), f32))
        wcat.append(jnp.concatenate(blocks_up + blocks_x2, axis=0))       # (12*Cmid, Cout)
    wcat = jnp.stack(wcat, axis=0)                                        # (2,12*Cmid,Cout)

    kernel = functools.partial(_decoder_kernel, H=H, W=W, WIN=WIN, Cout=Cout, C2=C2)

    out6 = pl.pallas_call(
        kernel,
        out_shape=jax.ShapeDtypeStruct((N, H, 2, W, 2 * Cout), f32),
        grid=(N,),
        in_specs=[
            pl.BlockSpec((1, H, WP, Cin), lambda n: (n, 0, 0, 0)),
            pl.BlockSpec((1, H + 1, 2, W + 1, 2 * C2), lambda n: (n, 0, 0, 0, 0)),
            pl.BlockSpec((2, 2, Cin, Cout), lambda n: (0, 0, 0, 0)),
            pl.BlockSpec((1, 1, Cout), lambda n: (0, 0, 0)),
            pl.BlockSpec((2, 12 * Cmid, Cout), lambda n: (0, 0, 0)),
            pl.BlockSpec((1, Cout), lambda n: (0, 0)),
        ],
        out_specs=pl.BlockSpec((1, H, 2, W, 2 * Cout), lambda n: (n, 0, 0, 0, 0)),
        scratch_shapes=[pltpu.VMEM((H + 1, 2, WIN, 2 * Cout), f32)],
        compiler_params=pltpu.CompilerParams(dimension_semantics=("parallel",)),
    )(x1p, x2p, w4, bup3, wcat, bc2)

    out_nhwc = out6.reshape(N, Ho, Wo, Cout)      # pure reshape (no data movement)
    return jnp.transpose(out_nhwc, (0, 3, 1, 2))  # back to NCHW


# -----------------------------------------------------------------------------
# Pure-JAX reference (correctness check only).
# -----------------------------------------------------------------------------
def decoder_reference(x1, x2, params):
    w_up, b_up = params["w_up"], params["b_up"]
    w_c, b_c = params["w_conv"], params["b_conv"]
    N, Cin, H, W = x1.shape
    Cout = b_up.shape[0]
    up = jnp.einsum("nihw,ioab->nohawb", x1, w_up).reshape(N, Cout, 2 * H, 2 * W)
    up = up + b_up[None, :, None, None]
    cat = jnp.concatenate([up, x2], axis=1)
    conv = jax.lax.conv_general_dilated(
        cat, w_c, window_strides=(1, 1), padding="SAME",
        dimension_numbers=("NCHW", "OIHW", "NCHW"))
    return jnp.maximum(conv + b_c[None, :, None, None], 0.0)


if __name__ == "__main__":
    # Decoder(in_channels=4, middle_channels=8, out_channels=4)
    N, Cin, H, W = 2, 4, 8, 8
    Cout, Cmid = 4, 8
    C2 = Cmid - Cout                      # skip-connection channels

    key = jax.random.PRNGKey(0)
    k1, k2, k3, k4, k5, k6 = jax.random.split(key, 6)

    params = {
        "w_up":   (0.1 * jax.random.normal(k1, (Cin, Cout, 2, 2))).astype(jnp.float32),
        "b_up":   (0.1 * jax.random.normal(k2, (Cout,))).astype(jnp.float32),
        "w_conv": (0.1 * jax.random.normal(k3, (Cout, Cmid, 3, 3))).astype(jnp.float32),
        "b_conv": (0.1 * jax.random.normal(k4, (Cout,))).astype(jnp.float32),
    }

    x1 = jax.random.normal(k5, (N, Cin, H, W), dtype=jnp.float32)
    x2 = jax.random.normal(k6, (N, C2, 2 * H, 2 * W), dtype=jnp.float32)

    out = jax.block_until_ready(decoder_forward(x1, x2, params))
    ref = jax.block_until_ready(decoder_reference(x1, x2, params))

    assert out.shape == (N, Cout, 2 * H, 2 * W), out.shape
    max_err = float(jnp.max(jnp.abs(out - ref)))
    assert max_err < 1e-3, f"mismatch vs reference: {max_err}"

    print("KERNEL_OK")
</pallas_src>

<mosaic_0001>
module attributes {stable_mosaic.version = 11 : i64} {
  func.func @_decoder_kernel(%arg0: i32, %arg1: memref<1x8x17x4xf32, #tpu.memory_space<vmem>>, %arg2: memref<1x9x2x9x8xf32, #tpu.memory_space<vmem>>, %arg3: memref<2x2x4x4xf32, #tpu.memory_space<vmem>>, %arg4: memref<1x1x4xf32, #tpu.memory_space<vmem>>, %arg5: memref<2x96x4xf32, #tpu.memory_space<vmem>>, %arg6: memref<1x4xf32, #tpu.memory_space<vmem>>, %arg7: memref<1x8x2x8x8xf32, #tpu.memory_space<vmem>>, %arg8: memref<9x2x16x8xf32, #tpu.memory_space<vmem>>) attributes {dimension_semantics = [#tpu.dimension_semantics<parallel>], iteration_bounds = array<i64: 2>, scalar_prefetch = 0 : i64, scratch_operands = 1 : i64, tpu.core_type = #tpu.core_type<tc>, window_params = [{transform_indices = @transform_0, window_bounds = array<i64: 1, 8, 17, 4>}, {transform_indices = @transform_1, window_bounds = array<i64: 1, 9, 2, 9, 8>}, {pipeline_mode = #tpu.pipeline_mode<synchronous>, transform_indices = @transform_2, window_bounds = array<i64: 2, 2, 4, 4>}, {pipeline_mode = #tpu.pipeline_mode<synchronous>, transform_indices = @transform_3, window_bounds = array<i64: 1, 1, 4>}, {pipeline_mode = #tpu.pipeline_mode<synchronous>, transform_indices = @transform_4, window_bounds = array<i64: 2, 96, 4>}, {pipeline_mode = #tpu.pipeline_mode<synchronous>, transform_indices = @transform_5, window_bounds = array<i64: 1, 4>}, {transform_indices = @transform_6, window_bounds = array<i64: 1, 8, 2, 8, 8>}]} {
    %c0 = arith.constant 0 : index
    %c0_0 = arith.constant 0 : index
    %c0_1 = arith.constant 0 : index
    %c0_2 = arith.constant 0 : index
    %0 = vector.load %arg1[%c0, %c0_0, %c0_1, %c0_2] : memref<1x8x17x4xf32, #tpu.memory_space<vmem>>, vector<1x8x16x4xf32>
    %1 = vector.shape_cast %0 : vector<1x8x16x4xf32> to vector<8x16x4xf32>
    %2 = vector.shape_cast %1 : vector<8x16x4xf32> to vector<128x4xf32>
    %c0_3 = arith.constant 0 : index
    %c0_4 = arith.constant 0 : index
    %c1 = arith.constant 1 : index
    %c0_5 = arith.constant 0 : index
    %3 = vector.load %arg1[%c0_3, %c0_4, %c1, %c0_5] : memref<1x8x17x4xf32, #tpu.memory_space<vmem>>, vector<1x8x16x4xf32>
    %4 = vector.shape_cast %3 : vector<1x8x16x4xf32> to vector<8x16x4xf32>
    %5 = vector.shape_cast %4 : vector<8x16x4xf32> to vector<128x4xf32>
    %6 = tpu.iota {dimensions = array<i32: 1>} : vector<1x16x1xi32>
    %c0_6 = arith.constant 0 : index
    %c0_7 = arith.constant 0 : index
    %c0_8 = arith.constant 0 : index
    %7 = vector.load %arg4[%c0_6, %c0_7, %c0_8] : memref<1x1x4xf32, #tpu.memory_space<vmem>>, vector<1x1x4xf32>
    %cst = arith.constant 0.000000e+00 : f32
    %8 = vector.broadcast %cst : f32 to vector<16x8xf32>
    %c0_9 = arith.constant 0 : index
    %c0_10 = arith.constant 0 : index
    %c0_11 = arith.constant 0 : index
    %c0_12 = arith.constant 0 : index
    %9 = vector.load %arg8[%c0_9, %c0_10, %c0_11, %c0_12] : memref<9x2x16x8xf32, #tpu.memory_space<vmem>>, vector<1x1x16x8xf32>
    %10 = vector.shape_cast %9 : vector<1x1x16x8xf32> to vector<16x8xf32>
    %11 = vector.shape_cast %8 : vector<16x8xf32> to vector<1x1x16x8xf32>
    tpu.vector_store %arg8[%c0_9, %c0_10, %c0_11, %c0_12], %11 {strides = array<i32>} : memref<9x2x16x8xf32, #tpu.memory_space<vmem>>, vector<1x1x16x8xf32>,
    %c8 = arith.constant 8 : index
    %c1_13 = arith.constant 1 : index
    %c0_14 = arith.constant 0 : index
    %c0_15 = arith.constant 0 : index
    %12 = vector.load %arg8[%c8, %c1_13, %c0_14, %c0_15] : memref<9x2x16x8xf32, #tpu.memory_space<vmem>>, vector<1x1x16x8xf32>
    %13 = vector.shape_cast %12 : vector<1x1x16x8xf32> to vector<16x8xf32>
    %14 = vector.shape_cast %8 : vector<16x8xf32> to vector<1x1x16x8xf32>
    tpu.vector_store %arg8[%c8, %c1_13, %c0_14, %c0_15], %14 {strides = array<i32>} : memref<9x2x16x8xf32, #tpu.memory_space<vmem>>, vector<1x1x16x8xf32>,
    %c0_16 = arith.constant 0 : index
    %c1_17 = arith.constant 1 : index
    %c0_18 = arith.constant 0 : index
    %c0_19 = arith.constant 0 : index
    %15 = vector.load %arg3[%c0_16, %c1_17, %c0_18, %c0_19] : memref<2x2x4x4xf32, #tpu.memory_space<vmem>>, vector<1x1x4x4xf32>
    %16 = vector.shape_cast %15 : vector<1x1x4x4xf32> to vector<4x4xf32>
    %cst_20 = arith.constant dense<0.000000e+00> : vector<128x4xf32>
    %17 = tpu.matmul %2, %16, %cst_20 {dimension_numbers = #tpu.dot_dimension_numbers<[1], [0], [0], [1], [0, 0, 1, 1], [], []>} : vector<128x4xf32>, vector<4x4xf32>, vector<128x4xf32> -> vector<128x4xf32>
    %18 = vector.shape_cast %17 : vector<128x4xf32> to vector<8x16x4xf32>
    %c0_21 = arith.constant 0 : index
    %c0_22 = arith.constant 0 : index
    %c0_23 = arith.constant 0 : index
    %c0_24 = arith.constant 0 : index
    %19 = vector.load %arg3[%c0_21, %c0_22, %c0_23, %c0_24] : memref<2x2x4x4xf32, #tpu.memory_space<vmem>>, vector<1x1x4x4xf32>
    %20 = vector.shape_cast %19 : vector<1x1x4x4xf32> to vector<4x4xf32>
    %cst_25 = arith.constant dense<0.000000e+00> : vector<128x4xf32>
    %21 = tpu.matmul %5, %20, %cst_25 {dimension_numbers = #tpu.dot_dimension_numbers<[1], [0], [0], [1], [0, 0, 1, 1], [], []>} : vector<128x4xf32>, vector<4x4xf32>, vector<128x4xf32> -> vector<128x4xf32>
    %22 = vector.shape_cast %21 : vector<128x4xf32> to vector<8x16x4xf32>
    %c1_i32 = arith.constant 1 : i32
    %23 = vector.broadcast %c1_i32 : i32 to vector<1x16x1xi32>
    %24 = arith.cmpi sge, %6, %23 : vector<1x16x1xi32>
    %c8_i32 = arith.constant 8 : i32
    %25 = vector.broadcast %c8_i32 : i32 to vector<1x16x1xi32>
    %26 = arith.cmpi sle, %6, %25 : vector<1x16x1xi32>
    %27 = arith.andi %24, %26 : vector<1x16x1xi1>
    %28 = vector.broadcast %7 : vector<1x1x4xf32> to vector<8x16x4xf32>
    %29 = arith.addf %18, %28 : vector<8x16x4xf32>
    %cst_26 = arith.constant 0.000000e+00 : f32
    %30 = vector.shape_cast %27 : vector<1x16x1xi1> to vector<1x16x1xi1>
    %31 = vector.broadcast %30 : vector<1x16x1xi1> to vector<8x16x4xi1>
    %32 = vector.broadcast %cst_26 : f32 to vector<8x16x4xf32>
    %33 = arith.select %31, %29, %32 : vector<8x16x4xi1>, vector<8x16x4xf32>
    %c7_i32 = arith.constant 7 : i32
    %34 = vector.broadcast %c7_i32 : i32 to vector<1x16x1xi32>
    %35 = arith.cmpi sle, %6, %34 : vector<1x16x1xi32>
    %36 = vector.broadcast %7 : vector<1x1x4xf32> to vector<8x16x4xf32>
    %37 = arith.addf %22, %36 : vector<8x16x4xf32>
    %cst_27 = arith.constant 0.000000e+00 : f32
    %38 = vector.shape_cast %35 : vector<1x16x1xi1> to vector<1x16x1xi1>
    %39 = vector.broadcast %38 : vector<1x16x1xi1> to vector<8x16x4xi1>
    %40 = vector.broadcast %cst_27 : f32 to vector<8x16x4xf32>
    %41 = arith.select %39, %37, %40 : vector<8x16x4xi1>, vector<8x16x4xf32>
    %42 = tpu.concatenate %33, %41 in 2 : vector<8x16x4xf32>, vector<8x16x4xf32> -> vector<8x16x8xf32>
    %c0_28 = arith.constant 0 : index
    %c1_29 = arith.constant 1 : index
    %c0_30 = arith.constant 0 : index
    %c0_31 = arith.constant 0 : index
    %43 = vector.load %arg8[%c0_28, %c1_29, %c0_30, %c0_31] : memref<9x2x16x8xf32, #tpu.memory_space<vmem>>, vector<8x1x16x8xf32>
    %44 = vector.shape_cast %43 : vector<8x1x16x8xf32> to vector<8x16x8xf32>
    %45 = vector.shape_cast %42 : vector<8x16x8xf32> to vector<8x1x16x8xf32>
    tpu.vector_store %arg8[%c0_28, %c1_29, %c0_30, %c0_31], %45 {strides = array<i32>} : memref<9x2x16x8xf32, #tpu.memory_space<vmem>>, vector<8x1x16x8xf32>,
    %c1_32 = arith.constant 1 : index
    %c1_33 = arith.constant 1 : index
    %c0_34 = arith.constant 0 : index
    %c0_35 = arith.constant 0 : index
    %46 = vector.load %arg3[%c1_32, %c1_33, %c0_34, %c0_35] : memref<2x2x4x4xf32, #tpu.memory_space<vmem>>, vector<1x1x4x4xf32>
    %47 = vector.shape_cast %46 : vector<1x1x4x4xf32> to vector<4x4xf32>
    %cst_36 = arith.constant dense<0.000000e+00> : vector<128x4xf32>
    %48 = tpu.matmul %2, %47, %cst_36 {dimension_numbers = #tpu.dot_dimension_numbers<[1], [0], [0], [1], [0, 0, 1, 1], [], []>} : vector<128x4xf32>, vector<4x4xf32>, vector<128x4xf32> -> vector<128x4xf32>
    %49 = vector.shape_cast %48 : vector<128x4xf32> to vector<8x16x4xf32>
    %c1_37 = arith.constant 1 : index
    %c0_38 = arith.constant 0 : index
    %c0_39 = arith.constant 0 : index
    %c0_40 = arith.constant 0 : index
    %50 = vector.load %arg3[%c1_37, %c0_38, %c0_39, %c0_40] : memref<2x2x4x4xf32, #tpu.memory_space<vmem>>, vector<1x1x4x4xf32>
    %51 = vector.shape_cast %50 : vector<1x1x4x4xf32> to vector<4x4xf32>
    %cst_41 = arith.constant dense<0.000000e+00> : vector<128x4xf32>
    %52 = tpu.matmul %5, %51, %cst_41 {dimension_numbers = #tpu.dot_dimension_numbers<[1], [0], [0], [1], [0, 0, 1, 1], [], []>} : vector<128x4xf32>, vector<4x4xf32>, vector<128x4xf32> -> vector<128x4xf32>
    %53 = vector.shape_cast %52 : vector<128x4xf32> to vector<8x16x4xf32>
    %c1_i32_42 = arith.constant 1 : i32
    %54 = vector.broadcast %c1_i32_42 : i32 to vector<1x16x1xi32>
    %55 = arith.cmpi sge, %6, %54 : vector<1x16x1xi32>
    %c8_i32_43 = arith.constant 8 : i32
    %56 = vector.broadcast %c8_i32_43 : i32 to vector<1x16x1xi32>
    %57 = arith.cmpi sle, %6, %56 : vector<1x16x1xi32>
    %58 = arith.andi %55, %57 : vector<1x16x1xi1>
    %59 = vector.broadcast %7 : vector<1x1x4xf32> to vector<8x16x4xf32>
    %60 = arith.addf %49, %59 : vector<8x16x4xf32>
    %cst_44 = arith.constant 0.000000e+00 : f32
    %61 = vector.shape_cast %58 : vector<1x16x1xi1> to vector<1x16x1xi1>
    %62 = vector.broadcast %61 : vector<1x16x1xi1> to vector<8x16x4xi1>
    %63 = vector.broadcast %cst_44 : f32 to vector<8x16x4xf32>
    %64 = arith.select %62, %60, %63 : vector<8x16x4xi1>, vector<8x16x4xf32>
    %c7_i32_45 = arith.constant 7 : i32
    %65 = vector.broadcast %c7_i32_45 : i32 to vector<1x16x1xi32>
    %66 = arith.cmpi sle, %6, %65 : vector<1x16x1xi32>
    %67 = vector.broadcast %7 : vector<1x1x4xf32> to vector<8x16x4xf32>
    %68 = arith.addf %53, %67 : vector<8x16x4xf32>
    %cst_46 = arith.constant 0.000000e+00 : f32
    %69 = vector.shape_cast %66 : vector<1x16x1xi1> to vector<1x16x1xi1>
    %70 = vector.broadcast %69 : vector<1x16x1xi1> to vector<8x16x4xi1>
    %71 = vector.broadcast %cst_46 : f32 to vector<8x16x4xf32>
    %72 = arith.select %70, %68, %71 : vector<8x16x4xi1>, vector<8x16x4xf32>
    %73 = tpu.concatenate %64, %72 in 2 : vector<8x16x4xf32>, vector<8x16x4xf32> -> vector<8x16x8xf32>
    %c1_47 = arith.constant 1 : index
    %c0_48 = arith.constant 0 : index
    %c0_49 = arith.constant 0 : index
    %c0_50 = arith.constant 0 : index
    %74 = vector.load %arg8[%c1_47, %c0_48, %c0_49, %c0_50] : memref<9x2x16x8xf32, #tpu.memory_space<vmem>>, vector<8x1x16x8xf32>
    %75 = vector.shape_cast %74 : vector<8x1x16x8xf32> to vector<8x16x8xf32>
    %76 = vector.shape_cast %73 : vector<8x16x8xf32> to vector<8x1x16x8xf32>
    tpu.vector_store %arg8[%c1_47, %c0_48, %c0_49, %c0_50], %76 {strides = array<i32>} : memref<9x2x16x8xf32, #tpu.memory_space<vmem>>, vector<8x1x16x8xf32>,
    %c0_51 = arith.constant 0 : index
    %c0_52 = arith.constant 0 : index
    %77 = vector.load %arg6[%c0_51, %c0_52] : memref<1x4xf32, #tpu.memory_space<vmem>>, vector<1x4xf32>
    %c0_53 = arith.constant 0 : index
    %c0_54 = arith.constant 0 : index
    %c0_55 = arith.constant 0 : index
    %c0_56 = arith.constant 0 : index
    %78 = vector.load %arg8[%c0_53, %c0_54, %c0_55, %c0_56] : memref<9x2x16x8xf32, #tpu.memory_space<vmem>>, vector<8x1x8x8xf32>
    %79 = vector.shape_cast %78 : vector<8x1x8x8xf32> to vector<8x8x8xf32>
    %c0_57 = arith.constant 0 : index
    %c0_58 = arith.constant 0 : index
    %c0_59 = arith.constant 0 : index
    %c0_60 = arith.constant 0 : index
    %c0_61 = arith.constant 0 : index
    %80 = vector.load %arg2[%c0_57, %c0_58, %c0_59, %c0_60, %c0_61] : memref<1x9x2x9x8xf32, #tpu.memory_space<vmem>>, vector<1x8x1x8x8xf32>
    %81 = vector.shape_cast %80 : vector<1x8x1x8x8xf32> to vector<8x8x8xf32>
    %82 = vector.shape_cast %79 : vector<8x8x8xf32> to vector<64x8xf32>
    %83 = vector.shape_cast %81 : vector<8x8x8xf32> to vector<64x8xf32>
    %c0_62 = arith.constant 0 : index
    %c0_63 = arith.constant 0 : index
    %c1_64 = arith.constant 1 : index
    %c0_65 = arith.constant 0 : index
    %84 = vector.load %arg8[%c0_62, %c0_63, %c1_64, %c0_65] : memref<9x2x16x8xf32, #tpu.memory_space<vmem>>, vector<8x1x8x8xf32>
    %85 = vector.shape_cast %84 : vector<8x1x8x8xf32> to vector<8x8x8xf32>
    %c0_66 = arith.constant 0 : index
    %c0_67 = arith.constant 0 : index
    %c0_68 = arith.constant 0 : index
    %c1_69 = arith.constant 1 : index
    %c0_70 = arith.constant 0 : index
    %86 = vector.load %arg2[%c0_66, %c0_67, %c0_68, %c1_69, %c0_70] : memref<1x9x2x9x8xf32, #tpu.memory_space<vmem>>, vector<1x8x1x8x8xf32>
    %87 = vector.shape_cast %86 : vector<1x8x1x8x8xf32> to vector<8x8x8xf32>
    %88 = vector.shape_cast %85 : vector<8x8x8xf32> to vector<64x8xf32>
    %89 = vector.shape_cast %87 : vector<8x8x8xf32> to vector<64x8xf32>
    %c0_71 = arith.constant 0 : index
    %c1_72 = arith.constant 1 : index
    %c0_73 = arith.constant 0 : index
    %c0_74 = arith.constant 0 : index
    %90 = vector.load %arg8[%c0_71, %c1_72, %c0_73, %c0_74] : memref<9x2x16x8xf32, #tpu.memory_space<vmem>>, vector<8x1x8x8xf32>
    %91 = vector.shape_cast %90 : vector<8x1x8x8xf32> to vector<8x8x8xf32>
    %c0_75 = arith.constant 0 : index
    %c0_76 = arith.constant 0 : index
    %c1_77 = arith.constant 1 : index
    %c0_78 = arith.constant 0 : index
    %c0_79 = arith.constant 0 : index
    %92 = vector.load %arg2[%c0_75, %c0_76, %c1_77, %c0_78, %c0_79] : memref<1x9x2x9x8xf32, #tpu.memory_space<vmem>>, vector<1x8x1x8x8xf32>
    %93 = vector.shape_cast %92 : vector<1x8x1x8x8xf32> to vector<8x8x8xf32>
    %94 = vector.shape_cast %91 : vector<8x8x8xf32> to vector<64x8xf32>
    %95 = vector.shape_cast %93 : vector<8x8x8xf32> to vector<64x8xf32>
    %c0_80 = arith.constant 0 : index
    %c1_81 = arith.constant 1 : index
    %c1_82 = arith.constant 1 : index
    %c0_83 = arith.constant 0 : index
    %96 = vector.load %arg8[%c0_80, %c1_81, %c1_82, %c0_83] : memref<9x2x16x8xf32, #tpu.memory_space<vmem>>, vector<8x1x8x8xf32>
    %97 = vector.shape_cast %96 : vector<8x1x8x8xf32> to vector<8x8x8xf32>
    %c0_84 = arith.constant 0 : index
    %c0_85 = arith.constant 0 : index
    %c1_86 = arith.constant 1 : index
    %c1_87 = arith.constant 1 : index
    %c0_88 = arith.constant 0 : index
    %98 = vector.load %arg2[%c0_84, %c0_85, %c1_86, %c1_87, %c0_88] : memref<1x9x2x9x8xf32, #tpu.memory_space<vmem>>, vector<1x8x1x8x8xf32>
    %99 = vector.shape_cast %98 : vector<1x8x1x8x8xf32> to vector<8x8x8xf32>
    %100 = vector.shape_cast %97 : vector<8x8x8xf32> to vector<64x8xf32>
    %101 = vector.shape_cast %99 : vector<8x8x8xf32> to vector<64x8xf32>
    %c1_89 = arith.constant 1 : index
    %c0_90 = arith.constant 0 : index
    %c0_91 = arith.constant 0 : index
    %c0_92 = arith.constant 0 : index
    %102 = vector.load %arg8[%c1_89, %c0_90, %c0_91, %c0_92] : memref<9x2x16x8xf32, #tpu.memory_space<vmem>>, vector<8x1x8x8xf32>
    %103 = vector.shape_cast %102 : vector<8x1x8x8xf32> to vector<8x8x8xf32>
    %c0_93 = arith.constant 0 : index
    %c1_94 = arith.constant 1 : index
    %c0_95 = arith.constant 0 : index
    %c0_96 = arith.constant 0 : index
    %c0_97 = arith.constant 0 : index
    %104 = vector.load %arg2[%c0_93, %c1_94, %c0_95, %c0_96, %c0_97] : memref<1x9x2x9x8xf32, #tpu.memory_space<vmem>>, vector<1x8x1x8x8xf32>
    %105 = vector.shape_cast %104 : vector<1x8x1x8x8xf32> to vector<8x8x8xf32>
    %106 = vector.shape_cast %103 : vector<8x8x8xf32> to vector<64x8xf32>
    %107 = vector.shape_cast %105 : vector<8x8x8xf32> to vector<64x8xf32>
    %c1_98 = arith.constant 1 : index
    %c0_99 = arith.constant 0 : index
    %c1_100 = arith.constant 1 : index
    %c0_101 = arith.constant 0 : index
    %108 = vector.load %arg8[%c1_98, %c0_99, %c1_100, %c0_101] : memref<9x2x16x8xf32, #tpu.memory_space<vmem>>, vector<8x1x8x8xf32>
    %109 = vector.shape_cast %108 : vector<8x1x8x8xf32> to vector<8x8x8xf32>
    %c0_102 = arith.constant 0 : index
    %c1_103 = arith.constant 1 : index
    %c0_104 = arith.constant 0 : index
    %c1_105 = arith.constant 1 : index
    %c0_106 = arith.constant 0 : index
    %110 = vector.load %arg2[%c0_102, %c1_103, %c0_104, %c1_105, %c0_106] : memref<1x9x2x9x8xf32, #tpu.memory_space<vmem>>, vector<1x8x1x8x8xf32>
    %111 = vector.shape_cast %110 : vector<1x8x1x8x8xf32> to vector<8x8x8xf32>
    %112 = vector.shape_cast %109 : vector<8x8x8xf32> to vector<64x8xf32>
    %113 = vector.shape_cast %111 : vector<8x8x8xf32> to vector<64x8xf32>
    %114 = tpu.concatenate %82, %88, %94, %100, %106, %112, %83, %89, %95, %101, %107, %113 in 1 : vector<64x8xf32>, vector<64x8xf32>, vector<64x8xf32>, vector<64x8xf32>, vector<64x8xf32>, vector<64x8xf32>, vector<64x8xf32>, vector<64x8xf32>, vector<64x8xf32>, vector<64x8xf32>, vector<64x8xf32>, vector<64x8xf32> -> vector<64x96xf32>
    %c0_107 = arith.constant 0 : index
    %c0_108 = arith.constant 0 : index
    %c0_109 = arith.constant 0 : index
    %115 = vector.load %arg5[%c0_107, %c0_108, %c0_109] : memref<2x96x4xf32, #tpu.memory_space<vmem>>, vector<1x96x4xf32>
    %116 = vector.shape_cast %115 : vector<1x96x4xf32> to vector<96x4xf32>
    %cst_110 = arith.constant dense<0.000000e+00> : vector<64x4xf32>
    %117 = tpu.matmul %114, %116, %cst_110 {dimension_numbers = #tpu.dot_dimension_numbers<[1], [0], [0], [1], [0, 0, 1, 1], [], []>} : vector<64x96xf32>, vector<96x4xf32>, vector<64x4xf32> -> vector<64x4xf32>
    %118 = vector.broadcast %77 : vector<1x4xf32> to vector<64x4xf32>
    %119 = arith.addf %117, %118 : vector<64x4xf32>
    %cst_111 = arith.constant 0.000000e+00 : f32
    %120 = vector.broadcast %cst_111 : f32 to vector<64x4xf32>
    %121 = arith.maximumf %119, %120 : vector<64x4xf32>
    %122 = vector.shape_cast %121 : vector<64x4xf32> to vector<8x8x4xf32>
    %c0_112 = arith.constant 0 : index
    %c0_113 = arith.constant 0 : index
    %c0_114 = arith.constant 0 : index
    %c0_115 = arith.constant 0 : index
    %123 = vector.load %arg8[%c0_112, %c0_113, %c0_114, %c0_115] : memref<9x2x16x8xf32, #tpu.memory_space<vmem>>, vector<8x1x8x8xf32>
    %124 = vector.shape_cast %123 : vector<8x1x8x8xf32> to vector<8x8x8xf32>
    %c0_116 = arith.constant 0 : index
    %c0_117 = arith.constant 0 : index
    %c0_118 = arith.constant 0 : index
    %c0_119 = arith.constant 0 : index
    %c0_120 = arith.constant 0 : index
    %125 = vector.load %arg2[%c0_116, %c0_117, %c0_118, %c0_119, %c0_120] : memref<1x9x2x9x8xf32, #tpu.memory_space<vmem>>, vector<1x8x1x8x8xf32>
    %126 = vector.shape_cast %125 : vector<1x8x1x8x8xf32> to vector<8x8x8xf32>
    %127 = vector.shape_cast %124 : vector<8x8x8xf32> to vector<64x8xf32>
    %128 = vector.shape_cast %126 : vector<8x8x8xf32> to vector<64x8xf32>
    %c0_121 = arith.constant 0 : index
    %c0_122 = arith.constant 0 : index
    %c1_123 = arith.constant 1 : index
    %c0_124 = arith.constant 0 : index
    %129 = vector.load %arg8[%c0_121, %c0_122, %c1_123, %c0_124] : memref<9x2x16x8xf32, #tpu.memory_space<vmem>>, vector<8x1x8x8xf32>
    %130 = vector.shape_cast %129 : vector<8x1x8x8xf32> to vector<8x8x8xf32>
    %c0_125 = arith.constant 0 : index
    %c0_126 = arith.constant 0 : index
    %c0_127 = arith.constant 0 : index
    %c1_128 = arith.constant 1 : index
    %c0_129 = arith.constant 0 : index
    %131 = vector.load %arg2[%c0_125, %c0_126, %c0_127, %c1_128, %c0_129] : memref<1x9x2x9x8xf32, #tpu.memory_space<vmem>>, vector<1x8x1x8x8xf32>
    %132 = vector.shape_cast %131 : vector<1x8x1x8x8xf32> to vector<8x8x8xf32>
    %133 = vector.shape_cast %130 : vector<8x8x8xf32> to vector<64x8xf32>
    %134 = vector.shape_cast %132 : vector<8x8x8xf32> to vector<64x8xf32>
    %c0_130 = arith.constant 0 : index
    %c1_131 = arith.constant 1 : index
    %c0_132 = arith.constant 0 : index
    %c0_133 = arith.constant 0 : index
    %135 = vector.load %arg8[%c0_130, %c1_131, %c0_132, %c0_133] : memref<9x2x16x8xf32, #tpu.memory_space<vmem>>, vector<8x1x8x8xf32>
    %136 = vector.shape_cast %135 : vector<8x1x8x8xf32> to vector<8x8x8xf32>
    %c0_134 = arith.constant 0 : index
    %c0_135 = arith.constant 0 : index
    %c1_136 = arith.constant 1 : index
    %c0_137 = arith.constant 0 : index
    %c0_138 = arith.constant 0 : index
    %137 = vector.load %arg2[%c0_134, %c0_135, %c1_136, %c0_137, %c0_138] : memref<1x9x2x9x8xf32, #tpu.memory_space<vmem>>, vector<1x8x1x8x8xf32>
    %138 = vector.shape_cast %137 : vector<1x8x1x8x8xf32> to vector<8x8x8xf32>
    %139 = vector.shape_cast %136 : vector<8x8x8xf32> to vector<64x8xf32>
    %140 = vector.shape_cast %138 : vector<8x8x8xf32> to vector<64x8xf32>
    %c0_139 = arith.constant 0 : index
    %c1_140 = arith.constant 1 : index
    %c1_141 = arith.constant 1 : index
    %c0_142 = arith.constant 0 : index
    %141 = vector.load %arg8[%c0_139, %c1_140, %c1_141, %c0_142] : memref<9x2x16x8xf32, #tpu.memory_space<vmem>>, vector<8x1x8x8xf32>
    %142 = vector.shape_cast %141 : vector<8x1x8x8xf32> to vector<8x8x8xf32>
    %c0_143 = arith.constant 0 : index
    %c0_144 = arith.constant 0 : index
    %c1_145 = arith.constant 1 : index
    %c1_146 = arith.constant 1 : index
    %c0_147 = arith.constant 0 : index
    %143 = vector.load %arg2[%c0_143, %c0_144, %c1_145, %c1_146, %c0_147] : memref<1x9x2x9x8xf32, #tpu.memory_space<vmem>>, vector<1x8x1x8x8xf32>
    %144 = vector.shape_cast %143 : vector<1x8x1x8x8xf32> to vector<8x8x8xf32>
    %145 = vector.shape_cast %142 : vector<8x8x8xf32> to vector<64x8xf32>
    %146 = vector.shape_cast %144 : vector<8x8x8xf32> to vector<64x8xf32>
    %c1_148 = arith.constant 1 : index
    %c0_149 = arith.constant 0 : index
    %c0_150 = arith.constant 0 : index
    %c0_151 = arith.constant 0 : index
    %147 = vector.load %arg8[%c1_148, %c0_149, %c0_150, %c0_151] : memref<9x2x16x8xf32, #tpu.memory_space<vmem>>, vector<8x1x8x8xf32>
    %148 = vector.shape_cast %147 : vector<8x1x8x8xf32> to vector<8x8x8xf32>
    %c0_152 = arith.constant 0 : index
    %c1_153 = arith.constant 1 : index
    %c0_154 = arith.constant 0 : index
    %c0_155 = arith.constant 0 : index
    %c0_156 = arith.constant 0 : index
    %149 = vector.load %arg2[%c0_152, %c1_153, %c0_154, %c0_155, %c0_156] : memref<1x9x2x9x8xf32, #tpu.memory_space<vmem>>, vector<1x8x1x8x8xf32>
    %150 = vector.shape_cast %149 : vector<1x8x1x8x8xf32> to vector<8x8x8xf32>
    %151 = vector.shape_cast %148 : vector<8x8x8xf32> to vector<64x8xf32>
    %152 = vector.shape_cast %150 : vector<8x8x8xf32> to vector<64x8xf32>
    %c1_157 = arith.constant 1 : index
    %c0_158 = arith.constant 0 : index
    %c1_159 = arith.constant 1 : index
    %c0_160 = arith.constant 0 : index
    %153 = vector.load %arg8[%c1_157, %c0_158, %c1_159, %c0_160] : memref<9x2x16x8xf32, #tpu.memory_space<vmem>>, vector<8x1x8x8xf32>
    %154 = vector.shape_cast %153 : vector<8x1x8x8xf32> to vector<8x8x8xf32>
    %c0_161 = arith.constant 0 : index
    %c1_162 = arith.constant 1 : index
    %c0_163 = arith.constant 0 : index
    %c1_164 = arith.constant 1 : index
    %c0_165 = arith.constant 0 : index
    %155 = vector.load %arg2[%c0_161, %c1_162, %c0_163, %c1_164, %c0_165] : memref<1x9x2x9x8xf32, #tpu.memory_space<vmem>>, vector<1x8x1x8x8xf32>
    %156 = vector.shape_cast %155 : vector<1x8x1x8x8xf32> to vector<8x8x8xf32>
    %157 = vector.shape_cast %154 : vector<8x8x8xf32> to vector<64x8xf32>
    %158 = vector.shape_cast %156 : vector<8x8x8xf32> to vector<64x8xf32>
    %159 = tpu.concatenate %127, %133, %139, %145, %151, %157, %128, %134, %140, %146, %152, %158 in 1 : vector<64x8xf32>, vector<64x8xf32>, vector<64x8xf32>, vector<64x8xf32>, vector<64x8xf32>, vector<64x8xf32>, vector<64x8xf32>, vector<64x8xf32>, vector<64x8xf32>, vector<64x8xf32>, vector<64x8xf32>, vector<64x8xf32> -> vector<64x96xf32>
    %c1_166 = arith.constant 1 : index
    %c0_167 = arith.constant 0 : index
    %c0_168 = arith.constant 0 : index
    %160 = vector.load %arg5[%c1_166, %c0_167, %c0_168] : memref<2x96x4xf32, #tpu.memory_space<vmem>>, vector<1x96x4xf32>
    %161 = vector.shape_cast %160 : vector<1x96x4xf32> to vector<96x4xf32>
    %cst_169 = arith.constant dense<0.000000e+00> : vector<64x4xf32>
    %162 = tpu.matmul %159, %161, %cst_169 {dimension_numbers = #tpu.dot_dimension_numbers<[1], [0], [0], [1], [0, 0, 1, 1], [], []>} : vector<64x96xf32>, vector<96x4xf32>, vector<64x4xf32> -> vector<64x4xf32>
    %163 = vector.broadcast %77 : vector<1x4xf32> to vector<64x4xf32>
    %164 = arith.addf %162, %163 : vector<64x4xf32>
    %cst_170 = arith.constant 0.000000e+00 : f32
    %165 = vector.broadcast %cst_170 : f32 to vector<64x4xf32>
    %166 = arith.maximumf %164, %165 : vector<64x4xf32>
    %167 = vector.shape_cast %166 : vector<64x4xf32> to vector<8x8x4xf32>
    %168 = tpu.concatenate %122, %167 in 2 : vector<8x8x4xf32>, vector<8x8x4xf32> -> vector<8x8x8xf32>
    %c0_171 = arith.constant 0 : index
    %c0_172 = arith.constant 0 : index
    %c0_173 = arith.constant 0 : index
    %c0_174 = arith.constant 0 : index
    %c0_175 = arith.constant 0 : index
    %169 = vector.load %arg7[%c0_171, %c0_172, %c0_173, %c0_174, %c0_175] : memref<1x8x2x8x8xf32, #tpu.memory_space<vmem>>, vector<1x8x1x8x8xf32>
    %170 = vector.shape_cast %169 : vector<1x8x1x8x8xf32> to vector<8x8x8xf32>
    %171 = vector.shape_cast %168 : vector<8x8x8xf32> to vector<1x8x1x8x8xf32>
    tpu.vector_store %arg7[%c0_171, %c0_172, %c0_173, %c0_174, %c0_175], %171 {strides = array<i32>} : memref<1x8x2x8x8xf32, #tpu.memory_space<vmem>>, vector<1x8x1x8x8xf32>,
    %c0_176 = arith.constant 0 : index
    %c1_177 = arith.constant 1 : index
    %c0_178 = arith.constant 0 : index
    %c0_179 = arith.constant 0 : index
    %172 = vector.load %arg8[%c0_176, %c1_177, %c0_178, %c0_179] : memref<9x2x16x8xf32, #tpu.memory_space<vmem>>, vector<8x1x8x8xf32>
    %173 = vector.shape_cast %172 : vector<8x1x8x8xf32> to vector<8x8x8xf32>
    %c0_180 = arith.constant 0 : index
    %c0_181 = arith.constant 0 : index
    %c1_182 = arith.constant 1 : index
    %c0_183 = arith.constant 0 : index
    %c0_184 = arith.constant 0 : index
    %174 = vector.load %arg2[%c0_180, %c0_181, %c1_182, %c0_183, %c0_184] : memref<1x9x2x9x8xf32, #tpu.memory_space<vmem>>, vector<1x8x1x8x8xf32>
    %175 = vector.shape_cast %174 : vector<1x8x1x8x8xf32> to vector<8x8x8xf32>
    %176 = vector.shape_cast %173 : vector<8x8x8xf32> to vector<64x8xf32>
    %177 = vector.shape_cast %175 : vector<8x8x8xf32> to vector<64x8xf32>
    %c0_185 = arith.constant 0 : index
    %c1_186 = arith.constant 1 : index
    %c1_187 = arith.constant 1 : index
    %c0_188 = arith.constant 0 : index
    %178 = vector.load %arg8[%c0_185, %c1_186, %c1_187, %c0_188] : memref<9x2x16x8xf32, #tpu.memory_space<vmem>>, vector<8x1x8x8xf32>
    %179 = vector.shape_cast %178 : vector<8x1x8x8xf32> to vector<8x8x8xf32>
    %c0_189 = arith.constant 0 : index
    %c0_190 = arith.constant 0 : index
    %c1_191 = arith.constant 1 : index
    %c1_192 = arith.constant 1 : index
    %c0_193 = arith.constant 0 : index
    %180 = vector.load %arg2[%c0_189, %c0_190, %c1_191, %c1_192, %c0_193] : memref<1x9x2x9x8xf32, #tpu.memory_space<vmem>>, vector<1x8x1x8x8xf32>
    %181 = vector.shape_cast %180 : vector<1x8x1x8x8xf32> to vector<8x8x8xf32>
    %182 = vector.shape_cast %179 : vector<8x8x8xf32> to vector<64x8xf32>
    %183 = vector.shape_cast %181 : vector<8x8x8xf32> to vector<64x8xf32>
    %c1_194 = arith.constant 1 : index
    %c0_195 = arith.constant 0 : index
    %c0_196 = arith.constant 0 : index
    %c0_197 = arith.constant 0 : index
    %184 = vector.load %arg8[%c1_194, %c0_195, %c0_196, %c0_197] : memref<9x2x16x8xf32, #tpu.memory_space<vmem>>, vector<8x1x8x8xf32>
    %185 = vector.shape_cast %184 : vector<8x1x8x8xf32> to vector<8x8x8xf32>
    %c0_198 = arith.constant 0 : index
    %c1_199 = arith.constant 1 : index
    %c0_200 = arith.constant 0 : index
    %c0_201 = arith.constant 0 : index
    %c0_202 = arith.constant 0 : index
    %186 = vector.load %arg2[%c0_198, %c1_199, %c0_200, %c0_201, %c0_202] : memref<1x9x2x9x8xf32, #tpu.memory_space<vmem>>, vector<1x8x1x8x8xf32>
    %187 = vector.shape_cast %186 : vector<1x8x1x8x8xf32> to vector<8x8x8xf32>
    %188 = vector.shape_cast %185 : vector<8x8x8xf32> to vector<64x8xf32>
    %189 = vector.shape_cast %187 : vector<8x8x8xf32> to vector<64x8xf32>
    %c1_203 = arith.constant 1 : index
    %c0_204 = arith.constant 0 : index
    %c1_205 = arith.constant 1 : index
    %c0_206 = arith.constant 0 : index
    %190 = vector.load %arg8[%c1_203, %c0_204, %c1_205, %c0_206] : memref<9x2x16x8xf32, #tpu.memory_space<vmem>>, vector<8x1x8x8xf32>
    %191 = vector.shape_cast %190 : vector<8x1x8x8xf32> to vector<8x8x8xf32>
    %c0_207 = arith.constant 0 : index
    %c1_208 = arith.constant 1 : index
    %c0_209 = arith.constant 0 : index
    %c1_210 = arith.constant 1 : index
    %c0_211 = arith.constant 0 : index
    %192 = vector.load %arg2[%c0_207, %c1_208, %c0_209, %c1_210, %c0_211] : memref<1x9x2x9x8xf32, #tpu.memory_space<vmem>>, vector<1x8x1x8x8xf32>
    %193 = vector.shape_cast %192 : vector<1x8x1x8x8xf32> to vector<8x8x8xf32>
    %194 = vector.shape_cast %191 : vector<8x8x8xf32> to vector<64x8xf32>
    %195 = vector.shape_cast %193 : vector<8x8x8xf32> to vector<64x8xf32>
    %c1_212 = arith.constant 1 : index
    %c1_213 = arith.constant 1 : index
    %c0_214 = arith.constant 0 : index
    %c0_215 = arith.constant 0 : index
    %196 = vector.load %arg8[%c1_212, %c1_213, %c0_214, %c0_215] : memref<9x2x16x8xf32, #tpu.memory_space<vmem>>, vector<8x1x8x8xf32>
    %197 = vector.shape_cast %196 : vector<8x1x8x8xf32> to vector<8x8x8xf32>
    %c0_216 = arith.constant 0 : index
    %c1_217 = arith.constant 1 : index
    %c1_218 = arith.constant 1 : index
    %c0_219 = arith.constant 0 : index
    %c0_220 = arith.constant 0 : index
    %198 = vector.load %arg2[%c0_216, %c1_217, %c1_218, %c0_219, %c0_220] : memref<1x9x2x9x8xf32, #tpu.memory_space<vmem>>, vector<1x8x1x8x8xf32>
    %199 = vector.shape_cast %198 : vector<1x8x1x8x8xf32> to vector<8x8x8xf32>
    %200 = vector.shape_cast %197 : vector<8x8x8xf32> to vector<64x8xf32>
    %201 = vector.shape_cast %199 : vector<8x8x8xf32> to vector<64x8xf32>
    %c1_221 = arith.constant 1 : index
    %c1_222 = arith.constant 1 : index
    %c1_223 = arith.constant 1 : index
    %c0_224 = arith.constant 0 : index
    %202 = vector.load %arg8[%c1_221, %c1_222, %c1_223, %c0_224] : memref<9x2x16x8xf32, #tpu.memory_space<vmem>>, vector<8x1x8x8xf32>
    %203 = vector.shape_cast %202 : vector<8x1x8x8xf32> to vector<8x8x8xf32>
    %c0_225 = arith.constant 0 : index
    %c1_226 = arith.constant 1 : index
    %c1_227 = arith.constant 1 : index
    %c1_228 = arith.constant 1 : index
    %c0_229 = arith.constant 0 : index
    %204 = vector.load %arg2[%c0_225, %c1_226, %c1_227, %c1_228, %c0_229] : memref<1x9x2x9x8xf32, #tpu.memory_space<vmem>>, vector<1x8x1x8x8xf32>
    %205 = vector.shape_cast %204 : vector<1x8x1x8x8xf32> to vector<8x8x8xf32>
    %206 = vector.shape_cast %203 : vector<8x8x8xf32> to vector<64x8xf32>
    %207 = vector.shape_cast %205 : vector<8x8x8xf32> to vector<64x8xf32>
    %208 = tpu.concatenate %176, %182, %188, %194, %200, %206, %177, %183, %189, %195, %201, %207 in 1 : vector<64x8xf32>, vector<64x8xf32>, vector<64x8xf32>, vector<64x8xf32>, vector<64x8xf32>, vector<64x8xf32>, vector<64x8xf32>, vector<64x8xf32>, vector<64x8xf32>, vector<64x8xf32>, vector<64x8xf32>, vector<64x8xf32> -> vector<64x96xf32>
    %c0_230 = arith.constant 0 : index
    %c0_231 = arith.constant 0 : index
    %c0_232 = arith.constant 0 : index
    %209 = vector.load %arg5[%c0_230, %c0_231, %c0_232] : memref<2x96x4xf32, #tpu.memory_space<vmem>>, vector<1x96x4xf32>
    %210 = vector.shape_cast %209 : vector<1x96x4xf32> to vector<96x4xf32>
    %cst_233 = arith.constant dense<0.000000e+00> : vector<64x4xf32>
    %211 = tpu.matmul %208, %210, %cst_233 {dimension_numbers = #tpu.dot_dimension_numbers<[1], [0], [0], [1], [0, 0, 1, 1], [], []>} : vector<64x96xf32>, vector<96x4xf32>, vector<64x4xf32> -> vector<64x4xf32>
    %212 = vector.broadcast %77 : vector<1x4xf32> to vector<64x4xf32>
    %213 = arith.addf %211, %212 : vector<64x4xf32>
    %cst_234 = arith.constant 0.000000e+00 : f32
    %214 = vector.broadcast %cst_234 : f32 to vector<64x4xf32>
    %215 = arith.maximumf %213, %214 : vector<64x4xf32>
    %216 = vector.shape_cast %215 : vector<64x4xf32> to vector<8x8x4xf32>
    %c0_235 = arith.constant 0 : index
    %c1_236 = arith.constant 1 : index
    %c0_237 = arith.constant 0 : index
    %c0_238 = arith.constant 0 : index
    %217 = vector.load %arg8[%c0_235, %c1_236, %c0_237, %c0_238] : memref<9x2x16x8xf32, #tpu.memory_space<vmem>>, vector<8x1x8x8xf32>
    %218 = vector.shape_cast %217 : vector<8x1x8x8xf32> to vector<8x8x8xf32>
    %c0_239 = arith.constant 0 : index
    %c0_240 = arith.constant 0 : index
    %c1_241 = arith.constant 1 : index
    %c0_242 = arith.constant 0 : index
    %c0_243 = arith.constant 0 : index
    %219 = vector.load %arg2[%c0_239, %c0_240, %c1_241, %c0_242, %c0_243] : memref<1x9x2x9x8xf32, #tpu.memory_space<vmem>>, vector<1x8x1x8x8xf32>
    %220 = vector.shape_cast %219 : vector<1x8x1x8x8xf32> to vector<8x8x8xf32>
    %221 = vector.shape_cast %218 : vector<8x8x8xf32> to vector<64x8xf32>
    %222 = vector.shape_cast %220 : vector<8x8x8xf32> to vector<64x8xf32>
    %c0_244 = arith.constant 0 : index
    %c1_245 = arith.constant 1 : index
    %c1_246 = arith.constant 1 : index
    %c0_247 = arith.constant 0 : index
    %223 = vector.load %arg8[%c0_244, %c1_245, %c1_246, %c0_247] : memref<9x2x16x8xf32, #tpu.memory_space<vmem>>, vector<8x1x8x8xf32>
    %224 = vector.shape_cast %223 : vector<8x1x8x8xf32> to vector<8x8x8xf32>
    %c0_248 = arith.constant 0 : index
    %c0_249 = arith.constant 0 : index
    %c1_250 = arith.constant 1 : index
    %c1_251 = arith.constant 1 : index
    %c0_252 = arith.constant 0 : index
    %225 = vector.load %arg2[%c0_248, %c0_249, %c1_250, %c1_251, %c0_252] : memref<1x9x2x9x8xf32, #tpu.memory_space<vmem>>, vector<1x8x1x8x8xf32>
    %226 = vector.shape_cast %225 : vector<1x8x1x8x8xf32> to vector<8x8x8xf32>
    %227 = vector.shape_cast %224 : vector<8x8x8xf32> to vector<64x8xf32>
    %228 = vector.shape_cast %226 : vector<8x8x8xf32> to vector<64x8xf32>
    %c1_253 = arith.constant 1 : index
    %c0_254 = arith.constant 0 : index
    %c0_255 = arith.constant 0 : index
    %c0_256 = arith.constant 0 : index
    %229 = vector.load %arg8[%c1_253, %c0_254, %c0_255, %c0_256] : memref<9x2x16x8xf32, #tpu.memory_space<vmem>>, vector<8x1x8x8xf32>
    %230 = vector.shape_cast %229 : vector<8x1x8x8xf32> to vector<8x8x8xf32>
    %c0_257 = arith.constant 0 : index
    %c1_258 = arith.constant 1 : index
    %c0_259 = arith.constant 0 : index
    %c0_260 = arith.constant 0 : index
    %c0_261 = arith.constant 0 : index
    %231 = vector.load %arg2[%c0_257, %c1_258, %c0_259, %c0_260, %c0_261] : memref<1x9x2x9x8xf32, #tpu.memory_space<vmem>>, vector<1x8x1x8x8xf32>
    %232 = vector.shape_cast %231 : vector<1x8x1x8x8xf32> to vector<8x8x8xf32>
    %233 = vector.shape_cast %230 : vector<8x8x8xf32> to vector<64x8xf32>
    %234 = vector.shape_cast %232 : vector<8x8x8xf32> to vector<64x8xf32>
    %c1_262 = arith.constant 1 : index
    %c0_263 = arith.constant 0 : index
    %c1_264 = arith.constant 1 : index
    %c0_265 = arith.constant 0 : index
    %235 = vector.load %arg8[%c1_262, %c0_263, %c1_264, %c0_265] : memref<9x2x16x8xf32, #tpu.memory_space<vmem>>, vector<8x1x8x8xf32>
    %236 = vector.shape_cast %235 : vector<8x1x8x8xf32> to vector<8x8x8xf32>
    %c0_266 = arith.constant 0 : index
    %c1_267 = arith.constant 1 : index
    %c0_268 = arith.constant 0 : index
    %c1_269 = arith.constant 1 : index
    %c0_270 = arith.constant 0 : index
    %237 = vector.load %arg2[%c0_266, %c1_267, %c0_268, %c1_269, %c0_270] : memref<1x9x2x9x8xf32, #tpu.memory_space<vmem>>, vector<1x8x1x8x8xf32>
    %238 = vector.shape_cast %237 : vector<1x8x1x8x8xf32> to vector<8x8x8xf32>
    %239 = vector.shape_cast %236 : vector<8x8x8xf32> to vector<64x8xf32>
    %240 = vector.shape_cast %238 : vector<8x8x8xf32> to vector<64x8xf32>
    %c1_271 = arith.constant 1 : index
    %c1_272 = arith.constant 1 : index
    %c0_273 = arith.constant 0 : index
    %c0_274 = arith.constant 0 : index
    %241 = vector.load %arg8[%c1_271, %c1_272, %c0_273, %c0_274] : memref<9x2x16x8xf32, #tpu.memory_space<vmem>>, vector<8x1x8x8xf32>
    %242 = vector.shape_cast %241 : vector<8x1x8x8xf32> to vector<8x8x8xf32>
    %c0_275 = arith.constant 0 : index
    %c1_276 = arith.constant 1 : index
    %c1_277 = arith.constant 1 : index
    %c0_278 = arith.constant 0 : index
    %c0_279 = arith.constant 0 : index
    %243 = vector.load %arg2[%c0_275, %c1_276, %c1_277, %c0_278, %c0_279] : memref<1x9x2x9x8xf32, #tpu.memory_space<vmem>>, vector<1x8x1x8x8xf32>
    %244 = vector.shape_cast %243 : vector<1x8x1x8x8xf32> to vector<8x8x8xf32>
    %245 = vector.shape_cast %242 : vector<8x8x8xf32> to vector<64x8xf32>
    %246 = vector.shape_cast %244 : vector<8x8x8xf32> to vector<64x8xf32>
    %c1_280 = arith.constant 1 : index
    %c1_281 = arith.constant 1 : index
    %c1_282 = arith.constant 1 : index
    %c0_283 = arith.constant 0 : index
    %247 = vector.load %arg8[%c1_280, %c1_281, %c1_282, %c0_283] : memref<9x2x16x8xf32, #tpu.memory_space<vmem>>, vector<8x1x8x8xf32>
    %248 = vector.shape_cast %247 : vector<8x1x8x8xf32> to vector<8x8x8xf32>
    %c0_284 = arith.constant 0 : index
    %c1_285 = arith.constant 1 : index
    %c1_286 = arith.constant 1 : index
    %c1_287 = arith.constant 1 : index
    %c0_288 = arith.constant 0 : index
    %249 = vector.load %arg2[%c0_284, %c1_285, %c1_286, %c1_287, %c0_288] : memref<1x9x2x9x8xf32, #tpu.memory_space<vmem>>, vector<1x8x1x8x8xf32>
    %250 = vector.shape_cast %249 : vector<1x8x1x8x8xf32> to vector<8x8x8xf32>
    %251 = vector.shape_cast %248 : vector<8x8x8xf32> to vector<64x8xf32>
    %252 = vector.shape_cast %250 : vector<8x8x8xf32> to vector<64x8xf32>
    %253 = tpu.concatenate %221, %227, %233, %239, %245, %251, %222, %228, %234, %240, %246, %252 in 1 : vector<64x8xf32>, vector<64x8xf32>, vector<64x8xf32>, vector<64x8xf32>, vector<64x8xf32>, vector<64x8xf32>, vector<64x8xf32>, vector<64x8xf32>, vector<64x8xf32>, vector<64x8xf32>, vector<64x8xf32>, vector<64x8xf32> -> vector<64x96xf32>
    %c1_289 = arith.constant 1 : index
    %c0_290 = arith.constant 0 : index
    %c0_291 = arith.constant 0 : index
    %254 = vector.load %arg5[%c1_289, %c0_290, %c0_291] : memref<2x96x4xf32, #tpu.memory_space<vmem>>, vector<1x96x4xf32>
    %255 = vector.shape_cast %254 : vector<1x96x4xf32> to vector<96x4xf32>
    %cst_292 = arith.constant dense<0.000000e+00> : vector<64x4xf32>
    %256 = tpu.matmul %253, %255, %cst_292 {dimension_numbers = #tpu.dot_dimension_numbers<[1], [0], [0], [1], [0, 0, 1, 1], [], []>} : vector<64x96xf32>, vector<96x4xf32>, vector<64x4xf32> -> vector<64x4xf32>
    %257 = vector.broadcast %77 : vector<1x4xf32> to vector<64x4xf32>
    %258 = arith.addf %256, %257 : vector<64x4xf32>
    %cst_293 = arith.constant 0.000000e+00 : f32
    %259 = vector.broadcast %cst_293 : f32 to vector<64x4xf32>
    %260 = arith.maximumf %258, %259 : vector<64x4xf32>
    %261 = vector.shape_cast %260 : vector<64x4xf32> to vector<8x8x4xf32>
    %262 = tpu.concatenate %216, %261 in 2 : vector<8x8x4xf32>, vector<8x8x4xf32> -> vector<8x8x8xf32>
    %c0_294 = arith.constant 0 : index
    %c0_295 = arith.constant 0 : index
    %c1_296 = arith.constant 1 : index
    %c0_297 = arith.constant 0 : index
    %c0_298 = arith.constant 0 : index
    %263 = vector.load %arg7[%c0_294, %c0_295, %c1_296, %c0_297, %c0_298] : memref<1x8x2x8x8xf32, #tpu.memory_space<vmem>>, vector<1x8x1x8x8xf32>
    %264 = vector.shape_cast %263 : vector<1x8x1x8x8xf32> to vector<8x8x8xf32>
    %265 = vector.shape_cast %262 : vector<8x8x8xf32> to vector<1x8x1x8x8xf32>
    tpu.vector_store %arg7[%c0_294, %c0_295, %c1_296, %c0_297, %c0_298], %265 {strides = array<i32>} : memref<1x8x2x8x8xf32, #tpu.memory_space<vmem>>, vector<1x8x1x8x8xf32>,
    return
  }
  func.func @transform_0(%arg0: i32) -> (i32, i32, i32, i32) {
    %c0_i32 = arith.constant 0 : i32
    %c0_i32_0 = arith.constant 0 : i32
    %c0_i32_1 = arith.constant 0 : i32
    %c0_i32_2 = arith.constant 0 : i32
    return %arg0, %c0_i32, %c0_i32_0, %c0_i32_1 : i32, i32, i32, i32
  }
  func.func @transform_1(%arg0: i32) -> (i32, i32, i32, i32, i32) {
    %c0_i32 = arith.constant 0 : i32
    %c0_i32_0 = arith.constant 0 : i32
    %c0_i32_1 = arith.constant 0 : i32
    %c0_i32_2 = arith.constant 0 : i32
    %c0_i32_3 = arith.constant 0 : i32
    return %arg0, %c0_i32, %c0_i32_0, %c0_i32_1, %c0_i32_2 : i32, i32, i32, i32, i32
  }
  func.func @transform_2(%arg0: i32) -> (i32, i32, i32, i32) {
    %c0_i32 = arith.constant 0 : i32
    %c0_i32_0 = arith.constant 0 : i32
    %c0_i32_1 = arith.constant 0 : i32
    %c0_i32_2 = arith.constant 0 : i32
    %c0_i32_3 = arith.constant 0 : i32
    return %c0_i32, %c0_i32_0, %c0_i32_1, %c0_i32_2 : i32, i32, i32, i32
  }
  func.func @transform_3(%arg0: i32) -> (i32, i32, i32) {
    %c0_i32 = arith.constant 0 : i32
    %c0_i32_0 = arith.constant 0 : i32
    %c0_i32_1 = arith.constant 0 : i32
    %c0_i32_2 = arith.constant 0 : i32
    return %c0_i32, %c0_i32_0, %c0_i32_1 : i32, i32, i32
  }
  func.func @transform_4(%arg0: i32) -> (i32, i32, i32) {
    %c0_i32 = arith.constant 0 : i32
    %c0_i32_0 = arith.constant 0 : i32
    %c0_i32_1 = arith.constant 0 : i32
    %c0_i32_2 = arith.constant 0 : i32
    return %c0_i32, %c0_i32_0, %c0_i32_1 : i32, i32, i32
  }
  func.func @transform_5(%arg0: i32) -> (i32, i32) {
    %c0_i32 = arith.constant 0 : i32
    %c0_i32_0 = arith.constant 0 : i32
    %c0_i32_1 = arith.constant 0 : i32
    return %c0_i32, %c0_i32_0 : i32, i32
  }
  func.func @transform_6(%arg0: i32) -> (i32, i32, i32, i32, i32) {
    %c0_i32 = arith.constant 0 : i32
    %c0_i32_0 = arith.constant 0 : i32
    %c0_i32_1 = arith.constant 0 : i32
    %c0_i32_2 = arith.constant 0 : i32
    %c0_i32_3 = arith.constant 0 : i32
    return %arg0, %c0_i32, %c0_i32_0, %c0_i32_1, %c0_i32_2 : i32, i32, i32, i32, i32
  }
}

</mosaic_0001>

<llo_original>
// kernel: tpu_custom_call.1
$region0: #{tpu_custom_call.1}
  #allocation0 [shape = 'u32[]', space=smem, size = 0x4, offset = 0x4, fixed_abs, tag = 'smem constant byte address 0x4 - core index']
  #allocation1 [shape = 'u32[72,128]{1,0:T(1,128)}', space=vmem, size = 0x9000, scoped, tag = 'internal scratch']
  #allocation2 [shape = 'f32[9,2,16,8]{3,2,1,0:T(8,128)}', space=vmem, size = 0x24000, scoped, tag = 'scratch operand']
  %s0 = inlined_call_operand.vmem [shape: f32[2,8,17,4], index: 0, kind: input, shape index: {}]
  %s1 = inlined_call_operand.vmem [shape: f32[2,9,2,9,8], index: 1, kind: input, shape index: {}]
  %s2 = inlined_call_operand.vmem [shape: f32[2,2,4,4], index: 2, kind: input, shape index: {}]
  %s3 = inlined_call_operand.vmem [shape: f32[1,1,4], index: 3, kind: input, shape index: {}]
  %s4 = inlined_call_operand.vmem [shape: f32[2,96,4], index: 4, kind: input, shape index: {}]
  %s5 = inlined_call_operand.vmem [shape: f32[1,4], index: 5, kind: input, shape index: {}]
  %s6 = inlined_call_operand.hbm [shape: f32[2,8,2,8,8], index: 6, kind: output, shape index: {}]
  %s7 = sld [smem:[#allocation0]]
  $region57: #{tpu_custom_call.1} parent=0
    _
  %s9 = ssub.s32 1, %s7
  %s10 = scalar_select 0, %s9, %s7
  $region1: #{tpu_custom_call.1} parent=0
    #allocation3 [shape = 'u8[131072]{0}', space=vmem, size = 0x20000, scoped, tag = 'output window, operand 0']
    #allocation4 [shape = 's32[2]{0}', space=sflag, size = 0x8, scoped, tag = 'scoped memory for tpu_custom_call.1']
    %11 = vsyncpa [#allocation4], 0
    %s12 = scalar_lea.sflag [#allocation4], 1
    %13 = vsyncpa %s12, 0
    loop: start=0, step=1, limit=4
    $region2: #{tpu_custom_call.1} parent=1 // loop_pre_header
      _
    $region3: #{tpu_custom_call.1} parent=1 // loop_header
      %s15 = sphi 0, %s19
      %p16 = scmp.ge.s32.totalorder %s15, 4
      %s25 = sphi 0, %s27
      %s28 = sphi 0, %s25
      %s29 = sphi 0, %s28
      %s45 = sphi 0, %s29
      %s51 = sphi 0, %s53
      %s54 = sphi 0, %s51
      %s55 = sphi 0, %s54
      %s71 = sphi 0, %s55
      %s75 = sphi 0, %s75
      %s77 = sphi 0, %s75
      %s78 = sphi 0, %s77
      %s92 = sphi 0, %s78
      %s96 = sphi 0, %s96
      %s98 = sphi 0, %s96
      %s99 = sphi 0, %s98
      %s113 = sphi 0, %s99
      %s117 = sphi 0, %s117
      %s119 = sphi 0, %s117
      %s120 = sphi 0, %s119
      %s134 = sphi 0, %s120
      %s138 = sphi 0, %s138
      %s140 = sphi 0, %s138
      %s141 = sphi 0, %s140
      %s155 = sphi 0, %s141
      %s161 = sphi 0, %s163
      %s164 = sphi 0, %s161
      %s165 = sphi 0, %s164
      %s181 = sphi 0, %s165
    $region4: #{tpu_custom_call.1} parent=1 // loop_header_branch
      %18 = sbr.rel (%p16) target = $region8
    $region5: #{tpu_custom_call.1} parent=1 // loop_body
      %s20 = ssub.s32 %s15, 1
      %s21 = ssub.s32 %s15, 2
      %s22 = sadd.s32 %s15, 1
      %s23 = ssub.s32 %s15, %s22
      %p24 = scmp.eq.s32.totalorder %s23, 0
      %s26 = sadd.s32 %s25, 1
      %s27 = scalar_select %p24, %s25, %s26
      %p30 = pneg %p24
      %p31 = scmp.eq.s32.totalorder %s15, 1
      %p32 = por %p30, %p31
      %p33 = scmp.ne.s32.totalorder %s25, %s28
      %p34 = scmp.eq.s32.totalorder %s15, 0
      %p35 = por %p33, %p34
      %p36 = scmp.ne.s32.totalorder %s25, %s28
      %p37 = scmp.eq.s32.totalorder %s20, 1
      %p38 = por %p36, %p37
      %p39 = scmp.ne.s32.totalorder %s28, %s29
      %p40 = scmp.eq.s32.totalorder %s20, 0
      %p41 = por %p39, %p40
      %p42 = scmp.ne.s32.totalorder %s28, %s29
      %p43 = scmp.eq.s32.totalorder %s21, 1
      %p44 = por %p42, %p43
      %p46 = scmp.ne.s32.totalorder %s29, %s45
      %p47 = scmp.eq.s32.totalorder %s21, 0
      %p48 = por %p46, %p47
      %s49 = ssub.s32 %s15, %s22
      %p50 = scmp.eq.s32.totalorder %s49, 0
      %s52 = sadd.s32 %s51, 1
      %s53 = scalar_select %p50, %s51, %s52
      %p56 = pneg %p50
      %p57 = scmp.eq.s32.totalorder %s15, 1
      %p58 = por %p56, %p57
      %p59 = scmp.ne.s32.totalorder %s51, %s54
      %p60 = scmp.eq.s32.totalorder %s15, 0
      %p61 = por %p59, %p60
      %p62 = scmp.ne.s32.totalorder %s51, %s54
      %p63 = scmp.eq.s32.totalorder %s20, 1
      %p64 = por %p62, %p63
      %p65 = scmp.ne.s32.totalorder %s54, %s55
      %p66 = scmp.eq.s32.totalorder %s20, 0
      %p67 = por %p65, %p66
      %p68 = scmp.ne.s32.totalorder %s54, %s55
      %p69 = scmp.eq.s32.totalorder %s21, 1
      %p70 = por %p68, %p69
      %p72 = scmp.ne.s32.totalorder %s55, %s71
      %p73 = scmp.eq.s32.totalorder %s21, 0
      %p74 = por %p72, %p73
      %s76 = sadd.s32 %s75, 1
      %p79 = scmp.eq.s32.totalorder %s15, 1
      %p80 = scmp.ne.s32.totalorder %s75, %s77
      %p81 = scmp.eq.s32.totalorder %s15, 0
      %p82 = por %p80, %p81
      %p83 = scmp.ne.s32.totalorder %s75, %s77
      %p84 = scmp.eq.s32.totalorder %s20, 1
      %p85 = por %p83, %p84
      %p86 = scmp.ne.s32.totalorder %s77, %s78
      %p87 = scmp.eq.s32.totalorder %s20, 0
      %p88 = por %p86, %p87
      %p89 = scmp.ne.s32.totalorder %s77, %s78
      %p90 = scmp.eq.s32.totalorder %s21, 1
      %p91 = por %p89, %p90
      %p93 = scmp.ne.s32.totalorder %s78, %s92
      %p94 = scmp.eq.s32.totalorder %s21, 0
      %p95 = por %p93, %p94
      %s97 = sadd.s32 %s96, 1
      %p100 = scmp.eq.s32.totalorder %s15, 1
      %p101 = scmp.ne.s32.totalorder %s96, %s98
      %p102 = scmp.eq.s32.totalorder %s15, 0
      %p103 = por %p101, %p102
      %p104 = scmp.ne.s32.totalorder %s96, %s98
      %p105 = scmp.eq.s32.totalorder %s20, 1
      %p106 = por %p104, %p105
      %p107 = scmp.ne.s32.totalorder %s98, %s99
      %p108 = scmp.eq.s32.totalorder %s20, 0
      %p109 = por %p107, %p108
      %p110 = scmp.ne.s32.totalorder %s98, %s99
      %p111 = scmp.eq.s32.totalorder %s21, 1
      %p112 = por %p110, %p111
      %p114 = scmp.ne.s32.totalorder %s99, %s113
      %p115 = scmp.eq.s32.totalorder %s21, 0
      %p116 = por %p114, %p115
      %s118 = sadd.s32 %s117, 1
      %p121 = scmp.eq.s32.totalorder %s15, 1
      %p122 = scmp.ne.s32.totalorder %s117, %s119
      %p123 = scmp.eq.s32.totalorder %s15, 0
      %p124 = por %p122, %p123
      %p125 = scmp.ne.s32.totalorder %s117, %s119
      %p126 = scmp.eq.s32.totalorder %s20, 1
      %p127 = por %p125, %p126
      %p128 = scmp.ne.s32.totalorder %s119, %s120
      %p129 = scmp.eq.s32.totalorder %s20, 0
      %p130 = por %p128, %p129
      %p131 = scmp.ne.s32.totalorder %s119, %s120
      %p132 = scmp.eq.s32.totalorder %s21, 1
      %p133 = por %p131, %p132
      %p135 = scmp.ne.s32.totalorder %s120, %s134
      %p136 = scmp.eq.s32.totalorder %s21, 0
      %p137 = por %p135, %p136
      %s139 = sadd.s32 %s138, 1
      %p142 = scmp.eq.s32.totalorder %s15, 1
      %p143 = scmp.ne.s32.totalorder %s138, %s140
      %p144 = scmp.eq.s32.totalorder %s15, 0
      %p145 = por %p143, %p144
      %p146 = scmp.ne.s32.totalorder %s138, %s140
      %p147 = scmp.eq.s32.totalorder %s20, 1
      %p148 = por %p146, %p147
      %p149 = scmp.ne.s32.totalorder %s140, %s141
      %p150 = scmp.eq.s32.totalorder %s20, 0
      %p151 = por %p149, %p150
      %p152 = scmp.ne.s32.totalorder %s140, %s141
      %p153 = scmp.eq.s32.totalorder %s21, 1
      %p154 = por %p152, %p153
      %p156 = scmp.ne.s32.totalorder %s141, %s155
      %p157 = scmp.eq.s32.totalorder %s21, 0
      %p158 = por %p156, %p157
      %s159 = ssub.s32 %s15, %s22
      %p160 = scmp.eq.s32.totalorder %s159, 0
      %s162 = sadd.s32 %s161, 1
      %s163 = scalar_select %p160, %s161, %s162
      %p166 = pneg %p160
      %p167 = scmp.eq.s32.totalorder %s15, 1
      %p168 = por %p166, %p167
      %p169 = scmp.ne.s32.totalorder %s161, %s164
      %p170 = scmp.eq.s32.totalorder %s15, 0
      %p171 = por %p169, %p170
      %p172 = scmp.ne.s32.totalorder %s161, %s164
      %p173 = scmp.eq.s32.totalorder %s20, 1
      %p174 = por %p172, %p173
      %p175 = scmp.ne.s32.totalorder %s164, %s165
      %p176 = scmp.eq.s32.totalorder %s20, 0
      %p177 = por %p175, %p176
      %p178 = scmp.ne.s32.totalorder %s164, %s165
      %p179 = scmp.eq.s32.totalorder %s21, 1
      %p180 = por %p178, %p179
      %p182 = scmp.ne.s32.totalorder %s165, %s181
      %p183 = scmp.eq.s32.totalorder %s21, 0
      %p184 = por %p182, %p183
      %p185 = scmp.le.s32.totalorder 1, %s15
      %p186 = scmp.lt.s32.totalorder %s15, 3
      %p187 = pnand %p185, %p186
      %p188 = pneg %p187
      // Predicated region
      $region9: #{tpu_custom_call.1} parent=5 // pred_check
        _
      $region10: #{tpu_custom_call.1} parent=5 // pred_check_branch
        %190 = sbr.rel (%p187) target = $region12
      $region11: #{tpu_custom_call.1} parent=5 // pred_region
        %s191 = ssub.s32 %s15, 1
        // Predicated region
        $region13: #{tpu_custom_call.1} parent=11 // pred_check
          %p192 = pneg %p88
        $region14: #{tpu_custom_call.1} parent=11 // pred_check_branch
          %194 = sbr.rel (%p192) target = $region16
        $region15: #{tpu_custom_call.1} parent=11 // pred_region
          _
        $region16: #{tpu_custom_call.1} parent=11 // pred_fallthru
          _
        // Predicated region
        $region17: #{tpu_custom_call.1} parent=11 // pred_check
          %p195 = pneg %p109
        $region18: #{tpu_custom_call.1} parent=11 // pred_check_branch
          %197 = sbr.rel (%p195) target = $region20
        $region19: #{tpu_custom_call.1} parent=11 // pred_region
          _
        $region20: #{tpu_custom_call.1} parent=11 // pred_fallthru
          _
        // Predicated region
        $region21: #{tpu_custom_call.1} parent=11 // pred_check
          %p198 = pneg %p130
        $region22: #{tpu_custom_call.1} parent=11 // pred_check_branch
          %200 = sbr.rel (%p198) target = $region24
        $region23: #{tpu_custom_call.1} parent=11 // pred_region
          _
        $region24: #{tpu_custom_call.1} parent=11 // pred_fallthru
          _
        // Predicated region
        $region25: #{tpu_custom_call.1} parent=11 // pred_check
          %p201 = pneg %p151
        $region26: #{tpu_custom_call.1} parent=11 // pred_check_branch
          %203 = sbr.rel (%p201) target = $region28
        $region27: #{tpu_custom_call.1} parent=11 // pred_region
          _
        $region28: #{tpu_custom_call.1} parent=11 // pred_fallthru
          _
      $region12: #{tpu_custom_call.1} parent=5 // pred_fallthru
        _
      %p204 = scmp.lt.s32.totalorder %s15, 2
      // Predicated region
      $region29: #{tpu_custom_call.1} parent=5 // pred_check
        %p205 = pneg %p204
      $region30: #{tpu_custom_call.1} parent=5 // pred_check_branch
        %207 = sbr.rel (%p205) target = $region32
      $region31: #{tpu_custom_call.1} parent=5 // pred_region
        // Predicated region
        $region33: #{tpu_custom_call.1} parent=31 // pred_check
          %p208 = pneg %p35
        $region34: #{tpu_custom_call.1} parent=31 // pred_check_branch
          %210 = sbr.rel (%p208) target = $region36
        $region35: #{tpu_custom_call.1} parent=31 // pred_region
          %p211 = scmp.lt.s32.totalorder %s15, 1
          %s212 = scalar_select %p211, %s15, 1
          %s213 = smul.addr %s212, 24
          %s214 = smul.addr %s213, 8
          %s215 = scalar_lea.vmem %s0, %s214
        $region36: #{tpu_custom_call.1} parent=31 // pred_fallthru
          _
        // Predicated region
        $region37: #{tpu_custom_call.1} parent=31 // pred_check
          %p216 = pneg %p61
        $region38: #{tpu_custom_call.1} parent=31 // pred_check_branch
          %218 = sbr.rel (%p216) target = $region40
        $region39: #{tpu_custom_call.1} parent=31 // pred_region
          %p219 = scmp.lt.s32.totalorder %s15, 1
          %s220 = scalar_select %p219, %s15, 1
          %s221 = smul.addr %s220, 36
          %s222 = smul.addr %s221, 8
          %s223 = scalar_lea.vmem %s1, %s222
        $region40: #{tpu_custom_call.1} parent=31 // pred_fallthru
          _
      $region32: #{tpu_custom_call.1} parent=5 // pred_fallthru
        _
      %p224 = scmp.le.s32.totalorder 1, %s15
      %p225 = scmp.lt.s32.totalorder %s15, 3
      %p226 = pnand %p224, %p225
      %p227 = pneg %p226
      // Predicated region
      $region41: #{tpu_custom_call.1} parent=5 // pred_check
        _
      $region42: #{tpu_custom_call.1} parent=5 // pred_check_branch
        %229 = sbr.rel (%p226) target = $region44
      $region43: #{tpu_custom_call.1} parent=5 // pred_region
        %s230 = ssub.s32 %s15, 1
        %p231 = scmp.lt.s32.totalorder %s20, 1
        %s232 = scalar_select %p231, %s20, 1
        %s233 = smul.addr %s232, 24
        %s234 = smul.addr %s233, 8
        %s235 = scalar_lea.vmem %s0, %s234
        %p236 = pneg %p41
        %p237 = pneg %p38
        %p238 = scmp.lt.s32.totalorder %s20, 1
        %s239 = scalar_select %p238, %s20, 1
        %s240 = smul.addr %s239, 36
        %s241 = smul.addr %s240, 8
        %s242 = scalar_lea.vmem %s1, %s241
        %p243 = pneg %p67
        %p244 = pneg %p64
        %p245 = pneg %p88
        %p246 = pneg %p85
        %p247 = pneg %p109
        %p248 = pneg %p106
        %p249 = pneg %p130
        %p250 = pneg %p127
        %p251 = pneg %p151
        %p252 = pneg %p148
        %p253 = pneg %p177
        %p254 = pneg %p174
        %s255 = sand.u32 %s164, 1
        %s256 = scalar_lea.sflag [#allocation4], %s255
        %s257 = sand.u32 %s164, 1
        %s258 = smul.addr %s257, 128
        %s259 = scalar_lea.vmem [#allocation3], %s258
        %p260 = scmp.lt.s32.totalorder %s20, 1
        %s261 = scalar_select %p260, %s20, 1
        %s262 = smul.addr %s261, 24
        %s263 = smul.addr %s262, 8
        %s264 = scalar_lea.vmem %s0, %s263
        %p265 = scmp.lt.s32.totalorder %s20, 1
        %s266 = scalar_select %p265, %s20, 1
        %s267 = smul.addr %s266, 36
        %s268 = smul.addr %s267, 8
        %s269 = scalar_lea.vmem %s1, %s268
        %v270 = vld [vmem:[%s264] sm:$0xff]
        %v271 = vld [vmem:[%s264 + $0x8] sm:$0xff]
        %v272 = vld [vmem:[%s264 + $0x18] sm:$0xff]
        %v273 = vld [vmem:[%s264 + $0x20] sm:$0xff]
        %v274 = vld [vmem:[%s264 + $0x30] sm:$0xff]
        %v275 = vld [vmem:[%s264 + $0x38] sm:$0xff]
        %v276 = vld [vmem:[%s264 + $0x48] sm:$0xff]
        %v277 = vld [vmem:[%s264 + $0x50] sm:$0xff]
        %v278 = vld [vmem:[%s264 + $0x60] sm:$0xff]
        %v279 = vld [vmem:[%s264 + $0x68] sm:$0xff]
        %v280 = vld [vmem:[%s264 + $0x78] sm:$0xff]
        %v281 = vld [vmem:[%s264 + $0x80] sm:$0xff]
        %v282 = vld [vmem:[%s264 + $0x90] sm:$0xff]
        %v283 = vld [vmem:[%s264 + $0x98] sm:$0xff]
        %v284 = vld [vmem:[%s264 + $0xa8] sm:$0xff]
        %v285 = vld [vmem:[%s264 + $0xb0] sm:$0xff]
        %v286 = vld [vmem:[%s264 + $0x1] sm:$0xff]
        %v287 = vld [vmem:[%s264 + $0x9] sm:$0xff]
        %v288 = vld [vmem:[%s264 + $0x19] sm:$0xff]
        %v289 = vld [vmem:[%s264 + $0x21] sm:$0xff]
        %v290 = vld [vmem:[%s264 + $0x31] sm:$0xff]
        %v291 = vld [vmem:[%s264 + $0x39] sm:$0xff]
        %v292 = vld [vmem:[%s264 + $0x49] sm:$0xff]
        %v293 = vld [vmem:[%s264 + $0x51] sm:$0xff]
        %v294 = vld [vmem:[%s264 + $0x61] sm:$0xff]
        %v295 = vld [vmem:[%s264 + $0x69] sm:$0xff]
        %v296 = vld [vmem:[%s264 + $0x79] sm:$0xff]
        %v297 = vld [vmem:[%s264 + $0x81] sm:$0xff]
        %v298 = vld [vmem:[%s264 + $0x91] sm:$0xff]
        %v299 = vld [vmem:[%s264 + $0x99] sm:$0xff]
        %v300 = vld [vmem:[%s264 + $0xa9] sm:$0xff]
        %v301 = vld [vmem:[%s264 + $0xb1] sm:$0xff]
        %v302 = vlaneseq
        %v303 = vshrl.u32 %v302, 7
        %v304 = vadd.s32 %v303, 8
        %v305 = vld [vmem:[%s3] sm:$0x1]
        %vm306 = vcmask 64512
        %307 = vst.msk [vmem:[#allocation2] sm:$0xff] %vm306, 0.0
        %308 = vst.msk [vmem:[#allocation2 + $0x8] sm:$0xff] %vm306, 0.0
        %s309 = scalar_lea.vmem [#allocation2], 272
        %310 = vst.msk [vmem:[%s309] sm:$0xff] %vm306, 0.0
        %311 = vst.msk [vmem:[%s309 + $0x8] sm:$0xff] %vm306, 0.0
        %s312 = scalar_lea.vmem %s2, 4
        %v313 = vld [vmem:[%s312] sm:$0xf]
        %vm314 = vcmask 31744
        %v316 = vsel %vm314, %v270, 0
        %v319 = vsel %vm314, %v271, 0
        %v322 = vsel %vm314, %v272, 0
        %v325 = vsel %vm314, %v273, 0
        %v328 = vsel %vm314, %v274, 0
        %v331 = vsel %vm314, %v275, 0
        %v334 = vsel %vm314, %v276, 0
        %v337 = vsel %vm314, %v277, 0
        %v340 = vsel %vm314, %v278, 0
        %v343 = vsel %vm314, %v279, 0
        %v346 = vsel %vm314, %v280, 0
        %v349 = vsel %vm314, %v281, 0
        %v352 = vsel %vm314, %v282, 0
        %v355 = vsel %vm314, %v283, 0
        %v358 = vsel %vm314, %v284, 0
        %v361 = vsel %vm314, %v285, 0
        %vm363 = vcmask 1043456
        %v365 = vsel %vm363, %v313, 0
        %367 = vmatpush.msra.mxu0 0.0
        %368 = vmatpush.msra.mxu0 0.0
        %369 = vmatpush.msra.mxu0 0.0
        %370 = vmatpush.msra.mxu0 0.0
        %371 = vmatpush.msra.mxu0 0.0
        %372 = vmatpush.msra.mxu0 0.0
        %373 = vmatpush.msra.mxu0 0.0
        %374 = vmatpush.msra.mxu0 0.0
        %375 = vmatpush.msra.mxu0 0.0
        %376 = vmatpush.msra.mxu0 0.0
        %377 = vmatpush.msra.mxu0 0.0
        %378 = vmatpush.msra.mxu0 0.0
        %379 = vmatpush.msra.mxu0 0.0
        %380 = vmatpush.msra.mxu0 0.0
        %381 = vmatpush.msra.mxu0 0.0
        %382 = vmatpush.msra.mxu0 %v365
        %383 = vmatmul.f32.gmra.mxu0 %v316
        %v384 = vpop.f32.mrf.mxu0
        %v385 = vadd.f32 0.0, %v384
        %386 = vmatmul.f32.gmra.mxu0 %v319
        %v387 = vpop.f32.mrf.mxu0
        %v388 = vadd.f32 0.0, %v387
        %389 = vmatmul.f32.gmra.mxu0 %v322
        %v390 = vpop.f32.mrf.mxu0
        %v391 = vadd.f32 0.0, %v390
        %392 = vmatmul.f32.gmra.mxu0 %v325
        %v393 = vpop.f32.mrf.mxu0
        %v394 = vadd.f32 0.0, %v393
        %395 = vmatmul.f32.gmra.mxu0 %v328
        %v396 = vpop.f32.mrf.mxu0
        %v397 = vadd.f32 0.0, %v396
        %398 = vmatmul.f32.gmra.mxu0 %v331
        %v399 = vpop.f32.mrf.mxu0
        %v400 = vadd.f32 0.0, %v399
        %401 = vmatmul.f32.gmra.mxu0 %v334
        %v402 = vpop.f32.mrf.mxu0
        %v403 = vadd.f32 0.0, %v402
        %404 = vmatmul.f32.gmra.mxu0 %v337
        %v405 = vpop.f32.mrf.mxu0
        %v406 = vadd.f32 0.0, %v405
        %407 = vmatmul.f32.gmra.mxu0 %v340
        %v408 = vpop.f32.mrf.mxu0
        %v409 = vadd.f32 0.0, %v408
        %410 = vmatmul.f32.gmra.mxu0 %v343
        %v411 = vpop.f32.mrf.mxu0
        %v412 = vadd.f32 0.0, %v411
        %413 = vmatmul.f32.gmra.mxu0 %v346
        %v414 = vpop.f32.mrf.mxu0
        %v415 = vadd.f32 0.0, %v414
        %416 = vmatmul.f32.gmra.mxu0 %v349
        %v417 = vpop.f32.mrf.mxu0
        %v418 = vadd.f32 0.0, %v417
        %419 = vmatmul.f32.gmra.mxu0 %v352
        %v420 = vpop.f32.mrf.mxu0
        %v421 = vadd.f32 0.0, %v420
        %422 = vmatmul.f32.gmra.mxu0 %v355
        %v423 = vpop.f32.mrf.mxu0
        %v424 = vadd.f32 0.0, %v423
        %425 = vmatmul.f32.gmra.mxu0 %v358
        %v426 = vpop.f32.mrf.mxu0
        %v427 = vadd.f32 0.0, %v426
        %428 = vmatmul.f32.gmra.mxu0 %v361
        %v429 = vpop.f32.mrf.mxu0
        %v430 = vadd.f32 0.0, %v429
        %431 = vdwg.mxu0
        %v432 = vld [vmem:[%s2] sm:$0xf]
        %v434 = vsel %vm314, %v286, 0
        %v437 = vsel %vm314, %v287, 0
        %v440 = vsel %vm314, %v288, 0
        %v443 = vsel %vm314, %v289, 0
        %v446 = vsel %vm314, %v290, 0
        %v449 = vsel %vm314, %v291, 0
        %v452 = vsel %vm314, %v292, 0
        %v455 = vsel %vm314, %v293, 0
        %v458 = vsel %vm314, %v294, 0
        %v461 = vsel %vm314, %v295, 0
        %v464 = vsel %vm314, %v296, 0
        %v467 = vsel %vm314, %v297, 0
        %v470 = vsel %vm314, %v298, 0
        %v473 = vsel %vm314, %v299, 0
        %v476 = vsel %vm314, %v300, 0
        %v479 = vsel %vm314, %v301, 0
        %v482 = vsel %vm363, %v432, 0
        %484 = vmatpush.msra.mxu0 0.0
        %485 = vmatpush.msra.mxu0 0.0
        %486 = vmatpush.msra.mxu0 0.0
        %487 = vmatpush.msra.mxu0 0.0
        %488 = vmatpush.msra.mxu0 0.0
        %489 = vmatpush.msra.mxu0 0.0
        %490 = vmatpush.msra.mxu0 0.0
        %491 = vmatpush.msra.mxu0 0.0
        %492 = vmatpush.msra.mxu0 0.0
        %493 = vmatpush.msra.mxu0 0.0
        %494 = vmatpush.msra.mxu0 0.0
        %495 = vmatpush.msra.mxu0 0.0
        %496 = vmatpush.msra.mxu0 0.0
        %497 = vmatpush.msra.mxu0 0.0
        %498 = vmatpush.msra.mxu0 0.0
        %499 = vmatpush.msra.mxu0 %v482
        %500 = vmatmul.f32.gmra.mxu0 %v434
        %v501 = vpop.f32.mrf.mxu0
        %v502 = vadd.f32 0.0, %v501
        %503 = vmatmul.f32.gmra.mxu0 %v437
        %v504 = vpop.f32.mrf.mxu0
        %v505 = vadd.f32 0.0, %v504
        %506 = vmatmul.f32.gmra.mxu0 %v440
        %v507 = vpop.f32.mrf.mxu0
        %v508 = vadd.f32 0.0, %v507
        %509 = vmatmul.f32.gmra.mxu0 %v443
        %v510 = vpop.f32.mrf.mxu0
        %v511 = vadd.f32 0.0, %v510
        %512 = vmatmul.f32.gmra.mxu0 %v446
        %v513 = vpop.f32.mrf.mxu0
        %v514 = vadd.f32 0.0, %v513
        %515 = vmatmul.f32.gmra.mxu0 %v449
        %v516 = vpop.f32.mrf.mxu0
        %v517 = vadd.f32 0.0, %v516
        %518 = vmatmul.f32.gmra.mxu0 %v452
        %v519 = vpop.f32.mrf.mxu0
        %v520 = vadd.f32 0.0, %v519
        %521 = vmatmul.f32.gmra.mxu0 %v455
        %v522 = vpop.f32.mrf.mxu0
        %v523 = vadd.f32 0.0, %v522
        %524 = vmatmul.f32.gmra.mxu0 %v458
        %v525 = vpop.f32.mrf.mxu0
        %v526 = vadd.f32 0.0, %v525
        %527 = vmatmul.f32.gmra.mxu0 %v461
        %v528 = vpop.f32.mrf.mxu0
        %v529 = vadd.f32 0.0, %v528
        %530 = vmatmul.f32.gmra.mxu0 %v464
        %v531 = vpop.f32.mrf.mxu0
        %v532 = vadd.f32 0.0, %v531
        %533 = vmatmul.f32.gmra.mxu0 %v467
        %v534 = vpop.f32.mrf.mxu0
        %v535 = vadd.f32 0.0, %v534
        %536 = vmatmul.f32.gmra.mxu0 %v470
        %v537 = vpop.f32.mrf.mxu0
        %v538 = vadd.f32 0.0, %v537
        %539 = vmatmul.f32.gmra.mxu0 %v473
        %v540 = vpop.f32.mrf.mxu0
        %v541 = vadd.f32 0.0, %v540
        %542 = vmatmul.f32.gmra.mxu0 %v476
        %v543 = vpop.f32.mrf.mxu0
        %v544 = vadd.f32 0.0, %v543
        %545 = vmatmul.f32.gmra.mxu0 %v479
        %v546 = vpop.f32.mrf.mxu0
        %v547 = vadd.f32 0.0, %v546
        %548 = vdwg.mxu0
        %vm549 = vcmp.ge.s32.totalorder %v303, 1
        %vm550 = vcmp.ge.s32.totalorder %v304, 1
        %vm551 = vcmp.le.s32.totalorder %v303, 8
        %vm552 = vcmp.le.s32.totalorder %v304, 8
        %vm553 = vmand %vm549, %vm551
        %vm554 = vmand %vm550, %vm552
        %v556 = vperm.slane %v305, 0
        %v558 = vadd.f32 %v385, %v556
        %v559 = vadd.f32 %v388, %v556
        %v560 = vadd.f32 %v391, %v556
        %v561 = vadd.f32 %v394, %v556
        %v562 = vadd.f32 %v397, %v556
        %v563 = vadd.f32 %v400, %v556
        %v564 = vadd.f32 %v403, %v556
        %v565 = vadd.f32 %v406, %v556
        %v566 = vadd.f32 %v409, %v556
        %v567 = vadd.f32 %v412, %v556
        %v568 = vadd.f32 %v415, %v556
        %v569 = vadd.f32 %v418, %v556
        %v570 = vadd.f32 %v421, %v556
        %v571 = vadd.f32 %v424, %v556
        %v572 = vadd.f32 %v427, %v556
        %v573 = vadd.f32 %v430, %v556
        %v574 = vsel %vm553, 1, 0
        %v575 = vsel %vm554, 1, 0
        %vm576 = vcmp.eq.s32.totalorder %v574, 1
        %vm577 = vcmp.eq.s32.totalorder %v575, 1
        %v578 = vsel %vm576, %v558, 0.0
        %v579 = vsel %vm577, %v559, 0.0
        %v580 = vsel %vm576, %v560, 0.0
        %v581 = vsel %vm577, %v561, 0.0
        %v582 = vsel %vm576, %v562, 0.0
        %v583 = vsel %vm577, %v563, 0.0
        %v584 = vsel %vm576, %v564, 0.0
        %v585 = vsel %vm577, %v565, 0.0
        %v586 = vsel %vm576, %v566, 0.0
        %v587 = vsel %vm577, %v567, 0.0
        %v588 = vsel %vm576, %v568, 0.0
        %v589 = vsel %vm577, %v569, 0.0
        %v590 = vsel %vm576, %v570, 0.0
        %v591 = vsel %vm577, %v571, 0.0
        %v592 = vsel %vm576, %v572, 0.0
        %v593 = vsel %vm577, %v573, 0.0
        %vm594 = vcmp.le.s32.totalorder %v303, 7
        %vm595 = vcmp.le.s32.totalorder %v304, 7
        %v596 = vadd.f32 %v502, %v556
        %v597 = vadd.f32 %v505, %v556
        %v598 = vadd.f32 %v508, %v556
        %v599 = vadd.f32 %v511, %v556
        %v600 = vadd.f32 %v514, %v556
        %v601 = vadd.f32 %v517, %v556
        %v602 = vadd.f32 %v520, %v556
        %v603 = vadd.f32 %v523, %v556
        %v604 = vadd.f32 %v526, %v556
        %v605 = vadd.f32 %v529, %v556
        %v606 = vadd.f32 %v532, %v556
        %v607 = vadd.f32 %v535, %v556
        %v608 = vadd.f32 %v538, %v556
        %v609 = vadd.f32 %v541, %v556
        %v610 = vadd.f32 %v544, %v556
        %v611 = vadd.f32 %v547, %v556
        %v612 = vsel %vm594, 1, 0
        %v613 = vsel %vm595, 1, 0
        %vm614 = vcmp.eq.s32.totalorder %v612, 1
        %vm615 = vcmp.eq.s32.totalorder %v613, 1
        %v616 = vsel %vm614, %v596, 0.0
        %v617 = vsel %vm615, %v597, 0.0
        %v618 = vsel %vm614, %v598, 0.0
        %v619 = vsel %vm615, %v599, 0.0
        %v620 = vsel %vm614, %v600, 0.0
        %v621 = vsel %vm615, %v601, 0.0
        %v622 = vsel %vm614, %v602, 0.0
        %v623 = vsel %vm615, %v603, 0.0
        %v624 = vsel %vm614, %v604, 0.0
        %v625 = vsel %vm615, %v605, 0.0
        %v626 = vsel %vm614, %v606, 0.0
        %v627 = vsel %vm615, %v607, 0.0
        %v628 = vsel %vm614, %v608, 0.0
        %v629 = vsel %vm615, %v609, 0.0
        %v630 = vsel %vm614, %v610, 0.0
        %v631 = vsel %vm615, %v611, 0.0
        %648 = vrot.lane.b32.xlu0 %v616, 4
        %v649 = vpop.permute.xlu0 %648
        %650 = vrot.lane.b32.xlu0 %v617, 4
        %v651 = vpop.permute.xlu0 %650
        %652 = vrot.lane.b32.xlu0 %v618, 4
        %v653 = vpop.permute.xlu0 %652
        %654 = vrot.lane.b32.xlu0 %v619, 4
        %v655 = vpop.permute.xlu0 %654
        %656 = vrot.lane.b32.xlu0 %v620, 4
        %v657 = vpop.permute.xlu0 %656
        %658 = vrot.lane.b32.xlu0 %v621, 4
        %v659 = vpop.permute.xlu0 %658
        %660 = vrot.lane.b32.xlu0 %v622, 4
        %v661 = vpop.permute.xlu0 %660
        %662 = vrot.lane.b32.xlu0 %v623, 4
        %v663 = vpop.permute.xlu0 %662
        %664 = vrot.lane.b32.xlu0 %v624, 4
        %v665 = vpop.permute.xlu0 %664
        %666 = vrot.lane.b32.xlu0 %v625, 4
        %v667 = vpop.permute.xlu0 %666
        %668 = vrot.lane.b32.xlu0 %v626, 4
        %v669 = vpop.permute.xlu0 %668
        %670 = vrot.lane.b32.xlu0 %v627, 4
        %v671 = vpop.permute.xlu0 %670
        %672 = vrot.lane.b32.xlu0 %v628, 4
        %v673 = vpop.permute.xlu0 %672
        %674 = vrot.lane.b32.xlu0 %v629, 4
        %v675 = vpop.permute.xlu0 %674
        %676 = vrot.lane.b32.xlu0 %v630, 4
        %v677 = vpop.permute.xlu0 %676
        %678 = vrot.lane.b32.xlu0 %v631, 4
        %v679 = vpop.permute.xlu0 %678
        %v696 = vsel %vm314, %v578, %v649
        %v697 = vsel %vm314, %v579, %v651
        %v698 = vsel %vm314, %v580, %v653
        %v699 = vsel %vm314, %v581, %v655
        %v700 = vsel %vm314, %v582, %v657
        %v701 = vsel %vm314, %v583, %v659
        %v702 = vsel %vm314, %v584, %v661
        %v703 = vsel %vm314, %v585, %v663
        %v704 = vsel %vm314, %v586, %v665
        %v705 = vsel %vm314, %v587, %v667
        %v706 = vsel %vm314, %v588, %v669
        %v707 = vsel %vm314, %v589, %v671
        %v708 = vsel %vm314, %v590, %v673
        %v709 = vsel %vm314, %v591, %v675
        %v710 = vsel %vm314, %v592, %v677
        %v711 = vsel %vm314, %v593, %v679
        %s712 = scalar_lea.vmem [#allocation2], 16
        %713 = vst.msk [vmem:[%s712] sm:$0xff] %vm306, %v696
        %714 = vst.msk [vmem:[%s712 + $0x8] sm:$0xff] %vm306, %v697
        %715 = vst.msk [vmem:[%s712 + $0x20] sm:$0xff] %vm306, %v698
        %716 = vst.msk [vmem:[%s712 + $0x28] sm:$0xff] %vm306, %v699
        %717 = vst.msk [vmem:[%s712 + $0x40] sm:$0xff] %vm306, %v700
        %718 = vst.msk [vmem:[%s712 + $0x48] sm:$0xff] %vm306, %v701
        %719 = vst.msk [vmem:[%s712 + $0x60] sm:$0xff] %vm306, %v702
        %720 = vst.msk [vmem:[%s712 + $0x68] sm:$0xff] %vm306, %v703
        %721 = vst.msk [vmem:[%s712 + $0x80] sm:$0xff] %vm306, %v704
        %722 = vst.msk [vmem:[%s712 + $0x88] sm:$0xff] %vm306, %v705
        %723 = vst.msk [vmem:[%s712 + $0xa0] sm:$0xff] %vm306, %v706
        %724 = vst.msk [vmem:[%s712 + $0xa8] sm:$0xff] %vm306, %v707
        %725 = vst.msk [vmem:[%s712 + $0xc0] sm:$0xff] %vm306, %v708
        %726 = vst.msk [vmem:[%s712 + $0xc8] sm:$0xff] %vm306, %v709
        %727 = vst.msk [vmem:[%s712 + $0xe0] sm:$0xff] %vm306, %v710
        %728 = vst.msk [vmem:[%s712 + $0xe8] sm:$0xff] %vm306, %v711
        %s729 = scalar_lea.vmem %s2, 12
        %v730 = vld [vmem:[%s729] sm:$0xf]
        %v732 = vsel %vm363, %v730, 0
        %734 = vmatpush.msra.mxu0 0.0
        %735 = vmatpush.msra.mxu0 0.0
        %736 = vmatpush.msra.mxu0 0.0
        %737 = vmatpush.msra.mxu0 0.0
        %738 = vmatpush.msra.mxu0 0.0
        %739 = vmatpush.msra.mxu0 0.0
        %740 = vmatpush.msra.mxu0 0.0
        %741 = vmatpush.msra.mxu0 0.0
        %742 = vmatpush.msra.mxu0 0.0
        %743 = vmatpush.msra.mxu0 0.0
        %744 = vmatpush.msra.mxu0 0.0
        %745 = vmatpush.msra.mxu0 0.0
        %746 = vmatpush.msra.mxu0 0.0
        %747 = vmatpush.msra.mxu0 0.0
        %748 = vmatpush.msra.mxu0 0.0
        %749 = vmatpush.msra.mxu0 %v732
        %750 = vmatmul.f32.gmra.mxu0 %v316
        %v751 = vpop.f32.mrf.mxu0
        %v752 = vadd.f32 0.0, %v751
        %753 = vmatmul.f32.gmra.mxu0 %v319
        %v754 = vpop.f32.mrf.mxu0
        %v755 = vadd.f32 0.0, %v754
        %756 = vmatmul.f32.gmra.mxu0 %v322
        %v757 = vpop.f32.mrf.mxu0
        %v758 = vadd.f32 0.0, %v757
        %759 = vmatmul.f32.gmra.mxu0 %v325
        %v760 = vpop.f32.mrf.mxu0
        %v761 = vadd.f32 0.0, %v760
        %762 = vmatmul.f32.gmra.mxu0 %v328
        %v763 = vpop.f32.mrf.mxu0
        %v764 = vadd.f32 0.0, %v763
        %765 = vmatmul.f32.gmra.mxu0 %v331
        %v766 = vpop.f32.mrf.mxu0
        %v767 = vadd.f32 0.0, %v766
        %768 = vmatmul.f32.gmra.mxu0 %v334
        %v769 = vpop.f32.mrf.mxu0
        %v770 = vadd.f32 0.0, %v769
        %771 = vmatmul.f32.gmra.mxu0 %v337
        %v772 = vpop.f32.mrf.mxu0
        %v773 = vadd.f32 0.0, %v772
        %774 = vmatmul.f32.gmra.mxu0 %v340
        %v775 = vpop.f32.mrf.mxu0
        %v776 = vadd.f32 0.0, %v775
        %777 = vmatmul.f32.gmra.mxu0 %v343
        %v778 = vpop.f32.mrf.mxu0
        %v779 = vadd.f32 0.0, %v778
        %780 = vmatmul.f32.gmra.mxu0 %v346
        %v781 = vpop.f32.mrf.mxu0
        %v782 = vadd.f32 0.0, %v781
        %783 = vmatmul.f32.gmra.mxu0 %v349
        %v784 = vpop.f32.mrf.mxu0
        %v785 = vadd.f32 0.0, %v784
        %786 = vmatmul.f32.gmra.mxu0 %v352
        %v787 = vpop.f32.mrf.mxu0
        %v788 = vadd.f32 0.0, %v787
        %789 = vmatmul.f32.gmra.mxu0 %v355
        %v790 = vpop.f32.mrf.mxu0
        %v791 = vadd.f32 0.0, %v790
        %792 = vmatmul.f32.gmra.mxu0 %v358
        %v793 = vpop.f32.mrf.mxu0
        %v794 = vadd.f32 0.0, %v793
        %795 = vmatmul.f32.gmra.mxu0 %v361
        %v796 = vpop.f32.mrf.mxu0
        %v797 = vadd.f32 0.0, %v796
        %798 = vdwg.mxu0
        %s799 = scalar_lea.vmem %s2, 8
        %v800 = vld [vmem:[%s799] sm:$0xf]
        %v802 = vsel %vm363, %v800, 0
        %804 = vmatpush.msra.mxu0 0.0
        %805 = vmatpush.msra.mxu0 0.0
        %806 = vmatpush.msra.mxu0 0.0
        %807 = vmatpush.msra.mxu0 0.0
        %808 = vmatpush.msra.mxu0 0.0
        %809 = vmatpush.msra.mxu0 0.0
        %810 = vmatpush.msra.mxu0 0.0
        %811 = vmatpush.msra.mxu0 0.0
        %812 = vmatpush.msra.mxu0 0.0
        %813 = vmatpush.msra.mxu0 0.0
        %814 = vmatpush.msra.mxu0 0.0
        %815 = vmatpush.msra.mxu0 0.0
        %816 = vmatpush.msra.mxu0 0.0
        %817 = vmatpush.msra.mxu0 0.0
        %818 = vmatpush.msra.mxu0 0.0
        %819 = vmatpush.msra.mxu0 %v802
        %820 = vmatmul.f32.gmra.mxu0 %v434
        %v821 = vpop.f32.mrf.mxu0
        %v822 = vadd.f32 0.0, %v821
        %823 = vmatmul.f32.gmra.mxu0 %v437
        %v824 = vpop.f32.mrf.mxu0
        %v825 = vadd.f32 0.0, %v824
        %826 = vmatmul.f32.gmra.mxu0 %v440
        %v827 = vpop.f32.mrf.mxu0
        %v828 = vadd.f32 0.0, %v827
        %829 = vmatmul.f32.gmra.mxu0 %v443
        %v830 = vpop.f32.mrf.mxu0
        %v831 = vadd.f32 0.0, %v830
        %832 = vmatmul.f32.gmra.mxu0 %v446
        %v833 = vpop.f32.mrf.mxu0
        %v834 = vadd.f32 0.0, %v833
        %835 = vmatmul.f32.gmra.mxu0 %v449
        %v836 = vpop.f32.mrf.mxu0
        %v837 = vadd.f32 0.0, %v836
        %838 = vmatmul.f32.gmra.mxu0 %v452
        %v839 = vpop.f32.mrf.mxu0
        %v840 = vadd.f32 0.0, %v839
        %841 = vmatmul.f32.gmra.mxu0 %v455
        %v842 = vpop.f32.mrf.mxu0
        %v843 = vadd.f32 0.0, %v842
        %844 = vmatmul.f32.gmra.mxu0 %v458
        %v845 = vpop.f32.mrf.mxu0
        %v846 = vadd.f32 0.0, %v845
        %847 = vmatmul.f32.gmra.mxu0 %v461
        %v848 = vpop.f32.mrf.mxu0
        %v849 = vadd.f32 0.0, %v848
        %850 = vmatmul.f32.gmra.mxu0 %v464
        %v851 = vpop.f32.mrf.mxu0
        %v852 = vadd.f32 0.0, %v851
        %853 = vmatmul.f32.gmra.mxu0 %v467
        %v854 = vpop.f32.mrf.mxu0
        %v855 = vadd.f32 0.0, %v854
        %856 = vmatmul.f32.gmra.mxu0 %v470
        %v857 = vpop.f32.mrf.mxu0
        %v858 = vadd.f32 0.0, %v857
        %859 = vmatmul.f32.gmra.mxu0 %v473
        %v860 = vpop.f32.mrf.mxu0
        %v861 = vadd.f32 0.0, %v860
        %862 = vmatmul.f32.gmra.mxu0 %v476
        %v863 = vpop.f32.mrf.mxu0
        %v864 = vadd.f32 0.0, %v863
        %865 = vmatmul.f32.gmra.mxu0 %v479
        %v866 = vpop.f32.mrf.mxu0
        %v867 = vadd.f32 0.0, %v866
        %868 = vdwg.mxu0
        %v869 = vadd.f32 %v752, %v556
        %v870 = vadd.f32 %v755, %v556
        %v871 = vadd.f32 %v758, %v556
        %v872 = vadd.f32 %v761, %v556
        %v873 = vadd.f32 %v764, %v556
        %v874 = vadd.f32 %v767, %v556
        %v875 = vadd.f32 %v770, %v556
        %v876 = vadd.f32 %v773, %v556
        %v877 = vadd.f32 %v776, %v556
        %v878 = vadd.f32 %v779, %v556
        %v879 = vadd.f32 %v782, %v556
        %v880 = vadd.f32 %v785, %v556
        %v881 = vadd.f32 %v788, %v556
        %v882 = vadd.f32 %v791, %v556
        %v883 = vadd.f32 %v794, %v556
        %v884 = vadd.f32 %v797, %v556
        %v885 = vsel %vm576, %v869, 0.0
        %v886 = vsel %vm577, %v870, 0.0
        %v887 = vsel %vm576, %v871, 0.0
        %v888 = vsel %vm577, %v872, 0.0
        %v889 = vsel %vm576, %v873, 0.0
        %v890 = vsel %vm577, %v874, 0.0
        %v891 = vsel %vm576, %v875, 0.0
        %v892 = vsel %vm577, %v876, 0.0
        %v893 = vsel %vm576, %v877, 0.0
        %v894 = vsel %vm577, %v878, 0.0
        %v895 = vsel %vm576, %v879, 0.0
        %v896 = vsel %vm577, %v880, 0.0
        %v897 = vsel %vm576, %v881, 0.0
        %v898 = vsel %vm577, %v882, 0.0
        %v899 = vsel %vm576, %v883, 0.0
        %v900 = vsel %vm577, %v884, 0.0
        %v901 = vadd.f32 %v822, %v556
        %v902 = vadd.f32 %v825, %v556
        %v903 = vadd.f32 %v828, %v556
        %v904 = vadd.f32 %v831, %v556
        %v905 = vadd.f32 %v834, %v556
        %v906 = vadd.f32 %v837, %v556
        %v907 = vadd.f32 %v840, %v556
        %v908 = vadd.f32 %v843, %v556
        %v909 = vadd.f32 %v846, %v556
        %v910 = vadd.f32 %v849, %v556
        %v911 = vadd.f32 %v852, %v556
        %v912 = vadd.f32 %v855, %v556
        %v913 = vadd.f32 %v858, %v556
        %v914 = vadd.f32 %v861, %v556
        %v915 = vadd.f32 %v864, %v556
        %v916 = vadd.f32 %v867, %v556
        %v917 = vsel %vm614, %v901, 0.0
        %v918 = vsel %vm615, %v902, 0.0
        %v919 = vsel %vm614, %v903, 0.0
        %v920 = vsel %vm615, %v904, 0.0
        %v921 = vsel %vm614, %v905, 0.0
        %v922 = vsel %vm615, %v906, 0.0
        %v923 = vsel %vm614, %v907, 0.0
        %v924 = vsel %vm615, %v908, 0.0
        %v925 = vsel %vm614, %v909, 0.0
        %v926 = vsel %vm615, %v910, 0.0
        %v927 = vsel %vm614, %v911, 0.0
        %v928 = vsel %vm615, %v912, 0.0
        %v929 = vsel %vm614, %v913, 0.0
        %v930 = vsel %vm615, %v914, 0.0
        %v931 = vsel %vm614, %v915, 0.0
        %v932 = vsel %vm615, %v916, 0.0
        %949 = vrot.lane.b32.xlu0 %v917, 4
        %v950 = vpop.permute.xlu0 %949
        %951 = vrot.lane.b32.xlu0 %v918, 4
        %v952 = vpop.permute.xlu0 %951
        %953 = vrot.lane.b32.xlu0 %v919, 4
        %v954 = vpop.permute.xlu0 %953
        %955 = vrot.lane.b32.xlu0 %v920, 4
        %v956 = vpop.permute.xlu0 %955
        %957 = vrot.lane.b32.xlu0 %v921, 4
        %v958 = vpop.permute.xlu0 %957
        %959 = vrot.lane.b32.xlu0 %v922, 4
        %v960 = vpop.permute.xlu0 %959
        %961 = vrot.lane.b32.xlu0 %v923, 4
        %v962 = vpop.permute.xlu0 %961
        %963 = vrot.lane.b32.xlu0 %v924, 4
        %v964 = vpop.permute.xlu0 %963
        %965 = vrot.lane.b32.xlu0 %v925, 4
        %v966 = vpop.permute.xlu0 %965
        %967 = vrot.lane.b32.xlu0 %v926, 4
        %v968 = vpop.permute.xlu0 %967
        %969 = vrot.lane.b32.xlu0 %v927, 4
        %v970 = vpop.permute.xlu0 %969
        %971 = vrot.lane.b32.xlu0 %v928, 4
        %v972 = vpop.permute.xlu0 %971
        %973 = vrot.lane.b32.xlu0 %v929, 4
        %v974 = vpop.permute.xlu0 %973
        %975 = vrot.lane.b32.xlu0 %v930, 4
        %v976 = vpop.permute.xlu0 %975
        %977 = vrot.lane.b32.xlu0 %v931, 4
        %v978 = vpop.permute.xlu0 %977
        %979 = vrot.lane.b32.xlu0 %v932, 4
        %v980 = vpop.permute.xlu0 %979
        %v997 = vsel %vm314, %v885, %v950
        %v998 = vsel %vm314, %v886, %v952
        %v999 = vsel %vm314, %v887, %v954
        %v1000 = vsel %vm314, %v888, %v956
        %v1001 = vsel %vm314, %v889, %v958
        %v1002 = vsel %vm314, %v890, %v960
        %v1003 = vsel %vm314, %v891, %v962
        %v1004 = vsel %vm314, %v892, %v964
        %v1005 = vsel %vm314, %v893, %v966
        %v1006 = vsel %vm314, %v894, %v968
        %v1007 = vsel %vm314, %v895, %v970
        %v1008 = vsel %vm314, %v896, %v972
        %v1009 = vsel %vm314, %v897, %v974
        %v1010 = vsel %vm314, %v898, %v976
        %v1011 = vsel %vm314, %v899, %v978
        %v1012 = vsel %vm314, %v900, %v980
        %s1013 = scalar_lea.vmem [#allocation2], 32
        %1014 = vst.msk [vmem:[%s1013] sm:$0xff] %vm306, %v997
        %1015 = vst.msk [vmem:[%s1013 + $0x8] sm:$0xff] %vm306, %v998
        %1016 = vst.msk [vmem:[%s1013 + $0x20] sm:$0xff] %vm306, %v999
        %1017 = vst.msk [vmem:[%s1013 + $0x28] sm:$0xff] %vm306, %v1000
        %1018 = vst.msk [vmem:[%s1013 + $0x40] sm:$0xff] %vm306, %v1001
        %1019 = vst.msk [vmem:[%s1013 + $0x48] sm:$0xff] %vm306, %v1002
        %1020 = vst.msk [vmem:[%s1013 + $0x60] sm:$0xff] %vm306, %v1003
        %1021 = vst.msk [vmem:[%s1013 + $0x68] sm:$0xff] %vm306, %v1004
        %1022 = vst.msk [vmem:[%s1013 + $0x80] sm:$0xff] %vm306, %v1005
        %1023 = vst.msk [vmem:[%s1013 + $0x88] sm:$0xff] %vm306, %v1006
        %1024 = vst.msk [vmem:[%s1013 + $0xa0] sm:$0xff] %vm306, %v1007
        %1025 = vst.msk [vmem:[%s1013 + $0xa8] sm:$0xff] %vm306, %v1008
        %1026 = vst.msk [vmem:[%s1013 + $0xc0] sm:$0xff] %vm306, %v1009
        %1027 = vst.msk [vmem:[%s1013 + $0xc8] sm:$0xff] %vm306, %v1010
        %1028 = vst.msk [vmem:[%s1013 + $0xe0] sm:$0xff] %vm306, %v1011
        %1029 = vst.msk [vmem:[%s1013 + $0xe8] sm:$0xff] %vm306, %v1012
        %v1030 = vld [vmem:[%s5] sm:$0x1]
        %v1031 = vld [vmem:[#allocation2] sm:$0xff]
        %v1032 = vld [vmem:[#allocation2 + $0x20] sm:$0xff]
        %v1033 = vld [vmem:[#allocation2 + $0x40] sm:$0xff]
        %v1034 = vld [vmem:[#allocation2 + $0x60] sm:$0xff]
        %v1035 = vld [vmem:[#allocation2 + $0x80] sm:$0xff]
        %v1036 = vld [vmem:[#allocation2 + $0xa0] sm:$0xff]
        %v1037 = vld [vmem:[#allocation2 + $0xc0] sm:$0xff]
        %v1038 = vld [vmem:[#allocation2 + $0xe0] sm:$0xff]
        %v1039 = vld [vmem:[%s269] sm:$0xff]
        %v1040 = vld [vmem:[%s269 + $0x20] sm:$0xff]
        %v1041 = vld [vmem:[%s269 + $0x40] sm:$0xff]
        %v1042 = vld [vmem:[%s269 + $0x60] sm:$0xff]
        %v1043 = vld [vmem:[%s269 + $0x80] sm:$0xff]
        %v1044 = vld [vmem:[%s269 + $0xa0] sm:$0xff]
        %v1045 = vld [vmem:[%s269 + $0xc0] sm:$0xff]
        %v1046 = vld [vmem:[%s269 + $0xe0] sm:$0xff]
        %v1047 = vld [vmem:[#allocation2 + $0x1] sm:$0xff]
        %v1048 = vld [vmem:[#allocation2 + $0x21] sm:$0xff]
        %v1049 = vld [vmem:[#allocation2 + $0x41] sm:$0xff]
        %v1050 = vld [vmem:[#allocation2 + $0x61] sm:$0xff]
        %v1051 = vld [vmem:[#allocation2 + $0x81] sm:$0xff]
        %v1052 = vld [vmem:[#allocation2 + $0xa1] sm:$0xff]
        %v1053 = vld [vmem:[#allocation2 + $0xc1] sm:$0xff]
        %v1054 = vld [vmem:[#allocation2 + $0xe1] sm:$0xff]
        %v1055 = vld [vmem:[%s269 + $0x1] sm:$0xff]
        %v1056 = vld [vmem:[%s269 + $0x21] sm:$0xff]
        %v1057 = vld [vmem:[%s269 + $0x41] sm:$0xff]
        %v1058 = vld [vmem:[%s269 + $0x61] sm:$0xff]
        %v1059 = vld [vmem:[%s269 + $0x81] sm:$0xff]
        %v1060 = vld [vmem:[%s269 + $0xa1] sm:$0xff]
        %v1061 = vld [vmem:[%s269 + $0xc1] sm:$0xff]
        %v1062 = vld [vmem:[%s269 + $0xe1] sm:$0xff]
        %v1063 = vld [vmem:[%s712] sm:$0xff]
        %v1064 = vld [vmem:[%s712 + $0x20] sm:$0xff]
        %v1065 = vld [vmem:[%s712 + $0x40] sm:$0xff]
        %v1066 = vld [vmem:[%s712 + $0x60] sm:$0xff]
        %v1067 = vld [vmem:[%s712 + $0x80] sm:$0xff]
        %v1068 = vld [vmem:[%s712 + $0xa0] sm:$0xff]
        %v1069 = vld [vmem:[%s712 + $0xc0] sm:$0xff]
        %v1070 = vld [vmem:[%s712 + $0xe0] sm:$0xff]
        %s1071 = scalar_lea.vmem %s269, 16
        %v1072 = vld [vmem:[%s1071] sm:$0xff]
        %v1073 = vld [vmem:[%s1071 + $0x20] sm:$0xff]
        %v1074 = vld [vmem:[%s1071 + $0x40] sm:$0xff]
        %v1075 = vld [vmem:[%s1071 + $0x60] sm:$0xff]
        %v1076 = vld [vmem:[%s1071 + $0x80] sm:$0xff]
        %v1077 = vld [vmem:[%s1071 + $0xa0] sm:$0xff]
        %v1078 = vld [vmem:[%s1071 + $0xc0] sm:$0xff]
        %v1079 = vld [vmem:[%s1071 + $0xe0] sm:$0xff]
        %v1080 = vld [vmem:[%s712 + $0x1] sm:$0xff]
        %v1081 = vld [vmem:[%s712 + $0x21] sm:$0xff]
        %v1082 = vld [vmem:[%s712 + $0x41] sm:$0xff]
        %v1083 = vld [vmem:[%s712 + $0x61] sm:$0xff]
        %v1084 = vld [vmem:[%s712 + $0x81] sm:$0xff]
        %v1085 = vld [vmem:[%s712 + $0xa1] sm:$0xff]
        %v1086 = vld [vmem:[%s712 + $0xc1] sm:$0xff]
        %v1087 = vld [vmem:[%s712 + $0xe1] sm:$0xff]
        %v1088 = vld [vmem:[%s1071 + $0x1] sm:$0xff]
        %v1089 = vld [vmem:[%s1071 + $0x21] sm:$0xff]
        %v1090 = vld [vmem:[%s1071 + $0x41] sm:$0xff]
        %v1091 = vld [vmem:[%s1071 + $0x61] sm:$0xff]
        %v1092 = vld [vmem:[%s1071 + $0x81] sm:$0xff]
        %v1093 = vld [vmem:[%s1071 + $0xa1] sm:$0xff]
        %v1094 = vld [vmem:[%s1071 + $0xc1] sm:$0xff]
        %v1095 = vld [vmem:[%s1071 + $0xe1] sm:$0xff]
        %v1096 = vld [vmem:[%s1013] sm:$0xff]
        %v1097 = vld [vmem:[%s1013 + $0x20] sm:$0xff]
        %v1098 = vld [vmem:[%s1013 + $0x40] sm:$0xff]
        %v1099 = vld [vmem:[%s1013 + $0x60] sm:$0xff]
        %v1100 = vld [vmem:[%s1013 + $0x80] sm:$0xff]
        %v1101 = vld [vmem:[%s1013 + $0xa0] sm:$0xff]
        %v1102 = vld [vmem:[%s1013 + $0xc0] sm:$0xff]
        %v1103 = vld [vmem:[%s1013 + $0xe0] sm:$0xff]
        %s1104 = scalar_lea.vmem %s269, 32
        %v1105 = vld [vmem:[%s1104] sm:$0xff]
        %v1106 = vld [vmem:[%s1104 + $0x20] sm:$0xff]
        %v1107 = vld [vmem:[%s1104 + $0x40] sm:$0xff]
        %v1108 = vld [vmem:[%s1104 + $0x60] sm:$0xff]
        %v1109 = vld [vmem:[%s1104 + $0x80] sm:$0xff]
        %v1110 = vld [vmem:[%s1104 + $0xa0] sm:$0xff]
        %v1111 = vld [vmem:[%s1104 + $0xc0] sm:$0xff]
        %v1112 = vld [vmem:[%s1104 + $0xe0] sm:$0xff]
        %v1113 = vld [vmem:[%s1013 + $0x1] sm:$0xff]
        %v1114 = vld [vmem:[%s1013 + $0x21] sm:$0xff]
        %v1115 = vld [vmem:[%s1013 + $0x41] sm:$0xff]
        %v1116 = vld [vmem:[%s1013 + $0x61] sm:$0xff]
        %v1117 = vld [vmem:[%s1013 + $0x81] sm:$0xff]
        %v1118 = vld [vmem:[%s1013 + $0xa1] sm:$0xff]
        %v1119 = vld [vmem:[%s1013 + $0xc1] sm:$0xff]
        %v1120 = vld [vmem:[%s1013 + $0xe1] sm:$0xff]
        %v1121 = vld [vmem:[%s1104 + $0x1] sm:$0xff]
        %v1122 = vld [vmem:[%s1104 + $0x21] sm:$0xff]
        %v1123 = vld [vmem:[%s1104 + $0x41] sm:$0xff]
        %v1124 = vld [vmem:[%s1104 + $0x61] sm:$0xff]
        %v1125 = vld [vmem:[%s1104 + $0x81] sm:$0xff]
        %v1126 = vld [vmem:[%s1104 + $0xa1] sm:$0xff]
        %v1127 = vld [vmem:[%s1104 + $0xc1] sm:$0xff]
        %v1128 = vld [vmem:[%s1104 + $0xe1] sm:$0xff]
        %1137 = vrot.lane.b32.xlu0 %v1047, 8
        %v1138 = vpop.permute.xlu0 %1137
        %1139 = vrot.lane.b32.xlu0 %v1048, 8
        %v1140 = vpop.permute.xlu0 %1139
        %1141 = vrot.lane.b32.xlu0 %v1049, 8
        %v1142 = vpop.permute.xlu0 %1141
        %1143 = vrot.lane.b32.xlu0 %v1050, 8
        %v1144 = vpop.permute.xlu0 %1143
        %1145 = vrot.lane.b32.xlu0 %v1051, 8
        %v1146 = vpop.permute.xlu0 %1145
        %1147 = vrot.lane.b32.xlu0 %v1052, 8
        %v1148 = vpop.permute.xlu0 %1147
        %1149 = vrot.lane.b32.xlu0 %v1053, 8
        %v1150 = vpop.permute.xlu0 %1149
        %1151 = vrot.lane.b32.xlu0 %v1054, 8
        %v1152 = vpop.permute.xlu0 %1151
        %1169 = vrot.lane.b32.xlu0 %v1063, 16
        %v1170 = vpop.permute.xlu0 %1169
        %1171 = vrot.lane.b32.xlu0 %v1064, 16
        %v1172 = vpop.permute.xlu0 %1171
        %1173 = vrot.lane.b32.xlu0 %v1065, 16
        %v1174 = vpop.permute.xlu0 %1173
        %1175 = vrot.lane.b32.xlu0 %v1066, 16
        %v1176 = vpop.permute.xlu0 %1175
        %1177 = vrot.lane.b32.xlu0 %v1067, 16
        %v1178 = vpop.permute.xlu0 %1177
        %1179 = vrot.lane.b32.xlu0 %v1068, 16
        %v1180 = vpop.permute.xlu0 %1179
        %1181 = vrot.lane.b32.xlu0 %v1069, 16
        %v1182 = vpop.permute.xlu0 %1181
        %1183 = vrot.lane.b32.xlu0 %v1070, 16
        %v1184 = vpop.permute.xlu0 %1183
        %1201 = vrot.lane.b32.xlu0 %v1080, 24
        %v1202 = vpop.permute.xlu0 %1201
        %1203 = vrot.lane.b32.xlu0 %v1081, 24
        %v1204 = vpop.permute.xlu0 %1203
        %1205 = vrot.lane.b32.xlu0 %v1082, 24
        %v1206 = vpop.permute.xlu0 %1205
        %1207 = vrot.lane.b32.xlu0 %v1083, 24
        %v1208 = vpop.permute.xlu0 %1207
        %1209 = vrot.lane.b32.xlu0 %v1084, 24
        %v1210 = vpop.permute.xlu0 %1209
        %1211 = vrot.lane.b32.xlu0 %v1085, 24
        %v1212 = vpop.permute.xlu0 %1211
        %1213 = vrot.lane.b32.xlu0 %v1086, 24
        %v1214 = vpop.permute.xlu0 %1213
        %1215 = vrot.lane.b32.xlu0 %v1087, 24
        %v1216 = vpop.permute.xlu0 %1215
        %1233 = vrot.lane.b32.xlu0 %v1096, 32
        %v1234 = vpop.permute.xlu0 %1233
        %1235 = vrot.lane.b32.xlu0 %v1097, 32
        %v1236 = vpop.permute.xlu0 %1235
        %1237 = vrot.lane.b32.xlu0 %v1098, 32
        %v1238 = vpop.permute.xlu0 %1237
        %1239 = vrot.lane.b32.xlu0 %v1099, 32
        %v1240 = vpop.permute.xlu0 %1239
        %1241 = vrot.lane.b32.xlu0 %v1100, 32
        %v1242 = vpop.permute.xlu0 %1241
        %1243 = vrot.lane.b32.xlu0 %v1101, 32
        %v1244 = vpop.permute.xlu0 %1243
        %1245 = vrot.lane.b32.xlu0 %v1102, 32
        %v1246 = vpop.permute.xlu0 %1245
        %1247 = vrot.lane.b32.xlu0 %v1103, 32
        %v1248 = vpop.permute.xlu0 %1247
        %1265 = vrot.lane.b32.xlu0 %v1113, 40
        %v1266 = vpop.permute.xlu0 %1265
        %1267 = vrot.lane.b32.xlu0 %v1114, 40
        %v1268 = vpop.permute.xlu0 %1267
        %1269 = vrot.lane.b32.xlu0 %v1115, 40
        %v1270 = vpop.permute.xlu0 %1269
        %1271 = vrot.lane.b32.xlu0 %v1116, 40
        %v1272 = vpop.permute.xlu0 %1271
        %1273 = vrot.lane.b32.xlu0 %v1117, 40
        %v1274 = vpop.permute.xlu0 %1273
        %1275 = vrot.lane.b32.xlu0 %v1118, 40
        %v1276 = vpop.permute.xlu0 %1275
        %1277 = vrot.lane.b32.xlu0 %v1119, 40
        %v1278 = vpop.permute.xlu0 %1277
        %1279 = vrot.lane.b32.xlu0 %v1120, 40
        %v1280 = vpop.permute.xlu0 %1279
        %1297 = vrot.lane.b32.xlu0 %v1039, 48
        %v1298 = vpop.permute.xlu0 %1297
        %1299 = vrot.lane.b32.xlu0 %v1040, 48
        %v1300 = vpop.permute.xlu0 %1299
        %1301 = vrot.lane.b32.xlu0 %v1041, 48
        %v1302 = vpop.permute.xlu0 %1301
        %1303 = vrot.lane.b32.xlu0 %v1042, 48
        %v1304 = vpop.permute.xlu0 %1303
        %1305 = vrot.lane.b32.xlu0 %v1043, 48
        %v1306 = vpop.permute.xlu0 %1305
        %1307 = vrot.lane.b32.xlu0 %v1044, 48
        %v1308 = vpop.permute.xlu0 %1307
        %1309 = vrot.lane.b32.xlu0 %v1045, 48
        %v1310 = vpop.permute.xlu0 %1309
        %1311 = vrot.lane.b32.xlu0 %v1046, 48
        %v1312 = vpop.permute.xlu0 %1311
        %1329 = vrot.lane.b32.xlu0 %v1055, 56
        %v1330 = vpop.permute.xlu0 %1329
        %1331 = vrot.lane.b32.xlu0 %v1056, 56
        %v1332 = vpop.permute.xlu0 %1331
        %1333 = vrot.lane.b32.xlu0 %v1057, 56
        %v1334 = vpop.permute.xlu0 %1333
        %1335 = vrot.lane.b32.xlu0 %v1058, 56
        %v1336 = vpop.permute.xlu0 %1335
        %1337 = vrot.lane.b32.xlu0 %v1059, 56
        %v1338 = vpop.permute.xlu0 %1337
        %1339 = vrot.lane.b32.xlu0 %v1060, 56
        %v1340 = vpop.permute.xlu0 %1339
        %1341 = vrot.lane.b32.xlu0 %v1061, 56
        %v1342 = vpop.permute.xlu0 %1341
        %1343 = vrot.lane.b32.xlu0 %v1062, 56
        %v1344 = vpop.permute.xlu0 %1343
        %1361 = vrot.lane.b32.xlu0 %v1072, 64
        %v1362 = vpop.permute.xlu0 %1361
        %1363 = vrot.lane.b32.xlu0 %v1073, 64
        %v1364 = vpop.permute.xlu0 %1363
        %1365 = vrot.lane.b32.xlu0 %v1074, 64
        %v1366 = vpop.permute.xlu0 %1365
        %1367 = vrot.lane.b32.xlu0 %v1075, 64
        %v1368 = vpop.permute.xlu0 %1367
        %1369 = vrot.lane.b32.xlu0 %v1076, 64
        %v1370 = vpop.permute.xlu0 %1369
        %1371 = vrot.lane.b32.xlu0 %v1077, 64
        %v1372 = vpop.permute.xlu0 %1371
        %1373 = vrot.lane.b32.xlu0 %v1078, 64
        %v1374 = vpop.permute.xlu0 %1373
        %1375 = vrot.lane.b32.xlu0 %v1079, 64
        %v1376 = vpop.permute.xlu0 %1375
        %1393 = vrot.lane.b32.xlu0 %v1088, 72
        %v1394 = vpop.permute.xlu0 %1393
        %1395 = vrot.lane.b32.xlu0 %v1089, 72
        %v1396 = vpop.permute.xlu0 %1395
        %1397 = vrot.lane.b32.xlu0 %v1090, 72
        %v1398 = vpop.permute.xlu0 %1397
        %1399 = vrot.lane.b32.xlu0 %v1091, 72
        %v1400 = vpop.permute.xlu0 %1399
        %1401 = vrot.lane.b32.xlu0 %v1092, 72
        %v1402 = vpop.permute.xlu0 %1401
        %1403 = vrot.lane.b32.xlu0 %v1093, 72
        %v1404 = vpop.permute.xlu0 %1403
        %1405 = vrot.lane.b32.xlu0 %v1094, 72
        %v1406 = vpop.permute.xlu0 %1405
        %1407 = vrot.lane.b32.xlu0 %v1095, 72
        %v1408 = vpop.permute.xlu0 %1407
        %1425 = vrot.lane.b32.xlu0 %v1105, 80
        %v1426 = vpop.permute.xlu0 %1425
        %1427 = vrot.lane.b32.xlu0 %v1106, 80
        %v1428 = vpop.permute.xlu0 %1427
        %1429 = vrot.lane.b32.xlu0 %v1107, 80
        %v1430 = vpop.permute.xlu0 %1429
        %1431 = vrot.lane.b32.xlu0 %v1108, 80
        %v1432 = vpop.permute.xlu0 %1431
        %1433 = vrot.lane.b32.xlu0 %v1109, 80
        %v1434 = vpop.permute.xlu0 %1433
        %1435 = vrot.lane.b32.xlu0 %v1110, 80
        %v1436 = vpop.permute.xlu0 %1435
        %1437 = vrot.lane.b32.xlu0 %v1111, 80
        %v1438 = vpop.permute.xlu0 %1437
        %1439 = vrot.lane.b32.xlu0 %v1112, 80
        %v1440 = vpop.permute.xlu0 %1439
        %1457 = vrot.lane.b32.xlu0 %v1121, 88
        %v1458 = vpop.permute.xlu0 %1457
        %1459 = vrot.lane.b32.xlu0 %v1122, 88
        %v1460 = vpop.permute.xlu0 %1459
        %1461 = vrot.lane.b32.xlu0 %v1123, 88
        %v1462 = vpop.permute.xlu0 %1461
        %1463 = vrot.lane.b32.xlu0 %v1124, 88
        %v1464 = vpop.permute.xlu0 %1463
        %1465 = vrot.lane.b32.xlu0 %v1125, 88
        %v1466 = vpop.permute.xlu0 %1465
        %1467 = vrot.lane.b32.xlu0 %v1126, 88
        %v1468 = vpop.permute.xlu0 %1467
        %1469 = vrot.lane.b32.xlu0 %v1127, 88
        %v1470 = vpop.permute.xlu0 %1469
        %1471 = vrot.lane.b32.xlu0 %v1128, 88
        %v1472 = vpop.permute.xlu0 %1471
        %v1481 = vsel %vm306, %v1031, %v1138
        %v1482 = vsel %vm306, %v1032, %v1140
        %v1483 = vsel %vm306, %v1033, %v1142
        %v1484 = vsel %vm306, %v1034, %v1144
        %v1485 = vsel %vm306, %v1035, %v1146
        %v1486 = vsel %vm306, %v1036, %v1148
        %v1487 = vsel %vm306, %v1037, %v1150
        %v1488 = vsel %vm306, %v1038, %v1152
        %vm1489 = vcmask 130048
        %v1490 = vsel %vm1489, %v1481, %v1170
        %v1491 = vsel %vm1489, %v1482, %v1172
        %v1492 = vsel %vm1489, %v1483, %v1174
        %v1493 = vsel %vm1489, %v1484, %v1176
        %v1494 = vsel %vm1489, %v1485, %v1178
        %v1495 = vsel %vm1489, %v1486, %v1180
        %v1496 = vsel %vm1489, %v1487, %v1182
        %v1497 = vsel %vm1489, %v1488, %v1184
        %vm1498 = vcmask 195584
        %v1499 = vsel %vm1498, %v1490, %v1202
        %v1500 = vsel %vm1498, %v1491, %v1204
        %v1501 = vsel %vm1498, %v1492, %v1206
        %v1502 = vsel %vm1498, %v1493, %v1208
        %v1503 = vsel %vm1498, %v1494, %v1210
        %v1504 = vsel %vm1498, %v1495, %v1212
        %v1505 = vsel %vm1498, %v1496, %v1214
        %v1506 = vsel %vm1498, %v1497, %v1216
        %vm1507 = vcmask 261120
        %v1508 = vsel %vm1507, %v1499, %v1234
        %v1509 = vsel %vm1507, %v1500, %v1236
        %v1510 = vsel %vm1507, %v1501, %v1238
        %v1511 = vsel %vm1507, %v1502, %v1240
        %v1512 = vsel %vm1507, %v1503, %v1242
        %v1513 = vsel %vm1507, %v1504, %v1244
        %v1514 = vsel %vm1507, %v1505, %v1246
        %v1515 = vsel %vm1507, %v1506, %v1248
        %vm1516 = vcmask 326656
        %v1517 = vsel %vm1516, %v1508, %v1266
        %v1518 = vsel %vm1516, %v1509, %v1268
        %v1519 = vsel %vm1516, %v1510, %v1270
        %v1520 = vsel %vm1516, %v1511, %v1272
        %v1521 = vsel %vm1516, %v1512, %v1274
        %v1522 = vsel %vm1516, %v1513, %v1276
        %v1523 = vsel %vm1516, %v1514, %v1278
        %v1524 = vsel %vm1516, %v1515, %v1280
        %vm1525 = vcmask 392192
        %v1526 = vsel %vm1525, %v1517, %v1298
        %v1527 = vsel %vm1525, %v1518, %v1300
        %v1528 = vsel %vm1525, %v1519, %v1302
        %v1529 = vsel %vm1525, %v1520, %v1304
        %v1530 = vsel %vm1525, %v1521, %v1306
        %v1531 = vsel %vm1525, %v1522, %v1308
        %v1532 = vsel %vm1525, %v1523, %v1310
        %v1533 = vsel %vm1525, %v1524, %v1312
        %vm1534 = vcmask 457728
        %v1535 = vsel %vm1534, %v1526, %v1330
        %v1536 = vsel %vm1534, %v1527, %v1332
        %v1537 = vsel %vm1534, %v1528, %v1334
        %v1538 = vsel %vm1534, %v1529, %v1336
        %v1539 = vsel %vm1534, %v1530, %v1338
        %v1540 = vsel %vm1534, %v1531, %v1340
        %v1541 = vsel %vm1534, %v1532, %v1342
        %v1542 = vsel %vm1534, %v1533, %v1344
        %vm1543 = vcmask 523264
        %v1544 = vsel %vm1543, %v1535, %v1362
        %v1545 = vsel %vm1543, %v1536, %v1364
        %v1546 = vsel %vm1543, %v1537, %v1366
        %v1547 = vsel %vm1543, %v1538, %v1368
        %v1548 = vsel %vm1543, %v1539, %v1370
        %v1549 = vsel %vm1543, %v1540, %v1372
        %v1550 = vsel %vm1543, %v1541, %v1374
        %v1551 = vsel %vm1543, %v1542, %v1376
        %vm1552 = vcmask 588800
        %v1553 = vsel %vm1552, %v1544, %v1394
        %v1554 = vsel %vm1552, %v1545, %v1396
        %v1555 = vsel %vm1552, %v1546, %v1398
        %v1556 = vsel %vm1552, %v1547, %v1400
        %v1557 = vsel %vm1552, %v1548, %v1402
        %v1558 = vsel %vm1552, %v1549, %v1404
        %v1559 = vsel %vm1552, %v1550, %v1406
        %v1560 = vsel %vm1552, %v1551, %v1408
        %vm1561 = vcmask 654336
        %v1562 = vsel %vm1561, %v1553, %v1426
        %v1563 = vsel %vm1561, %v1554, %v1428
        %v1564 = vsel %vm1561, %v1555, %v1430
        %v1565 = vsel %vm1561, %v1556, %v1432
        %v1566 = vsel %vm1561, %v1557, %v1434
        %v1567 = vsel %vm1561, %v1558, %v1436
        %v1568 = vsel %vm1561, %v1559, %v1438
        %v1569 = vsel %vm1561, %v1560, %v1440
        %vm1570 = vcmask 719872
        %v1571 = vsel %vm1570, %v1562, %v1458
        %v1572 = vsel %vm1570, %v1563, %v1460
        %v1573 = vsel %vm1570, %v1564, %v1462
        %v1574 = vsel %vm1570, %v1565, %v1464
        %v1575 = vsel %vm1570, %v1566, %v1466
        %v1576 = vsel %vm1570, %v1567, %v1468
        %v1577 = vsel %vm1570, %v1568, %v1470
        %v1578 = vsel %vm1570, %v1569, %v1472
        %v1579 = vld [vmem:[%s4] sm:$0xff]
        %v1580 = vld [vmem:[%s4 + $0x8] sm:$0xff]
        %v1581 = vld [vmem:[%s4 + $0x10] sm:$0xff]
        %v1582 = vld [vmem:[%s4 + $0x18] sm:$0xff]
        %v1583 = vld [vmem:[%s4 + $0x20] sm:$0xff]
        %v1584 = vld [vmem:[%s4 + $0x28] sm:$0xff]
        %v1585 = vld [vmem:[%s4 + $0x30] sm:$0xff]
        %v1586 = vld [vmem:[%s4 + $0x38] sm:$0xff]
        %v1587 = vld [vmem:[%s4 + $0x40] sm:$0xff]
        %v1588 = vld [vmem:[%s4 + $0x48] sm:$0xff]
        %v1589 = vld [vmem:[%s4 + $0x50] sm:$0xff]
        %v1590 = vld [vmem:[%s4 + $0x58] sm:$0xff]
        %v1592 = vperm.slane %v1030, 0
        %vm1594 = vcmask 785408
        %v1596 = vsel %vm1594, %v1571, 0
        %v1599 = vsel %vm1594, %v1572, 0
        %v1602 = vsel %vm1594, %v1573, 0
        %v1605 = vsel %vm1594, %v1574, 0
        %v1608 = vsel %vm1594, %v1575, 0
        %v1611 = vsel %vm1594, %v1576, 0
        %v1614 = vsel %vm1594, %v1577, 0
        %v1617 = vsel %vm1594, %v1578, 0
        %1619 = vmatpush.msra.mxu0 0.0
        %1620 = vmatpush.msra.mxu0 0.0
        %1621 = vmatpush.msra.mxu0 0.0
        %1622 = vmatpush.msra.mxu0 0.0
        %1623 = vmatpush.msra.mxu0 %v1590
        %1624 = vmatpush.msra.mxu0 %v1589
        %1625 = vmatpush.msra.mxu0 %v1588
        %1626 = vmatpush.msra.mxu0 %v1587
        %1627 = vmatpush.msra.mxu0 %v1586
        %1628 = vmatpush.msra.mxu0 %v1585
        %1629 = vmatpush.msra.mxu0 %v1584
        %1630 = vmatpush.msra.mxu0 %v1583
        %1631 = vmatpush.msra.mxu0 %v1582
        %1632 = vmatpush.msra.mxu0 %v1581
        %1633 = vmatpush.msra.mxu0 %v1580
        %1634 = vmatpush.msra.mxu0 %v1579
        %1635 = vmatmul.f32.gmra.mxu0 %v1596
        %v1636 = vpop.f32.mrf.mxu0
        %v1637 = vadd.f32 %v1592, %v1636
        %1638 = vmatmul.f32.gmra.mxu0 %v1599
        %v1639 = vpop.f32.mrf.mxu0
        %v1640 = vadd.f32 %v1592, %v1639
        %1641 = vmatmul.f32.gmra.mxu0 %v1602
        %v1642 = vpop.f32.mrf.mxu0
        %v1643 = vadd.f32 %v1592, %v1642
        %1644 = vmatmul.f32.gmra.mxu0 %v1605
        %v1645 = vpop.f32.mrf.mxu0
        %v1646 = vadd.f32 %v1592, %v1645
        %1647 = vmatmul.f32.gmra.mxu0 %v1608
        %v1648 = vpop.f32.mrf.mxu0
        %v1649 = vadd.f32 %v1592, %v1648
        %1650 = vmatmul.f32.gmra.mxu0 %v1611
        %v1651 = vpop.f32.mrf.mxu0
        %v1652 = vadd.f32 %v1592, %v1651
        %1653 = vmatmul.f32.gmra.mxu0 %v1614
        %v1654 = vpop.f32.mrf.mxu0
        %v1655 = vadd.f32 %v1592, %v1654
        %1656 = vmatmul.f32.gmra.mxu0 %v1617
        %v1657 = vpop.f32.mrf.mxu0
        %v1658 = vadd.f32 %v1592, %v1657
        %1659 = vdwg.mxu0
        %v1660 = vmax.f32 %v1637, 0.0
        %v1661 = vmax.f32 %v1640, 0.0
        %v1662 = vmax.f32 %v1643, 0.0
        %v1663 = vmax.f32 %v1646, 0.0
        %v1664 = vmax.f32 %v1649, 0.0
        %v1665 = vmax.f32 %v1652, 0.0
        %v1666 = vmax.f32 %v1655, 0.0
        %v1667 = vmax.f32 %v1658, 0.0
        %s1668 = scalar_lea.vmem %s4, 96
        %v1669 = vld [vmem:[%s1668] sm:$0xff]
        %v1670 = vld [vmem:[%s1668 + $0x8] sm:$0xff]
        %v1671 = vld [vmem:[%s1668 + $0x10] sm:$0xff]
        %v1672 = vld [vmem:[%s1668 + $0x18] sm:$0xff]
        %v1673 = vld [vmem:[%s1668 + $0x20] sm:$0xff]
        %v1674 = vld [vmem:[%s1668 + $0x28] sm:$0xff]
        %v1675 = vld [vmem:[%s1668 + $0x30] sm:$0xff]
        %v1676 = vld [vmem:[%s1668 + $0x38] sm:$0xff]
        %v1677 = vld [vmem:[%s1668 + $0x40] sm:$0xff]
        %v1678 = vld [vmem:[%s1668 + $0x48] sm:$0xff]
        %v1679 = vld [vmem:[%s1668 + $0x50] sm:$0xff]
        %v1680 = vld [vmem:[%s1668 + $0x58] sm:$0xff]
        %1681 = vmatpush.msra.mxu0 0.0
        %1682 = vmatpush.msra.mxu0 0.0
        %1683 = vmatpush.msra.mxu0 0.0
        %1684 = vmatpush.msra.mxu0 0.0
        %1685 = vmatpush.msra.mxu0 %v1680
        %1686 = vmatpush.msra.mxu0 %v1679
        %1687 = vmatpush.msra.mxu0 %v1678
        %1688 = vmatpush.msra.mxu0 %v1677
        %1689 = vmatpush.msra.mxu0 %v1676
        %1690 = vmatpush.msra.mxu0 %v1675
        %1691 = vmatpush.msra.mxu0 %v1674
        %1692 = vmatpush.msra.mxu0 %v1673
        %1693 = vmatpush.msra.mxu0 %v1672
        %1694 = vmatpush.msra.mxu0 %v1671
        %1695 = vmatpush.msra.mxu0 %v1670
        %1696 = vmatpush.msra.mxu0 %v1669
        %1697 = vmatmul.f32.gmra.mxu0 %v1596
        %v1698 = vpop.f32.mrf.mxu0
        %v1699 = vadd.f32 %v1592, %v1698
        %1700 = vmatmul.f32.gmra.mxu0 %v1599
        %v1701 = vpop.f32.mrf.mxu0
        %v1702 = vadd.f32 %v1592, %v1701
        %1703 = vmatmul.f32.gmra.mxu0 %v1602
        %v1704 = vpop.f32.mrf.mxu0
        %v1705 = vadd.f32 %v1592, %v1704
        %1706 = vmatmul.f32.gmra.mxu0 %v1605
        %v1707 = vpop.f32.mrf.mxu0
        %v1708 = vadd.f32 %v1592, %v1707
        %1709 = vmatmul.f32.gmra.mxu0 %v1608
        %v1710 = vpop.f32.mrf.mxu0
        %v1711 = vadd.f32 %v1592, %v1710
        %1712 = vmatmul.f32.gmra.mxu0 %v1611
        %v1713 = vpop.f32.mrf.mxu0
        %v1714 = vadd.f32 %v1592, %v1713
        %1715 = vmatmul.f32.gmra.mxu0 %v1614
        %v1716 = vpop.f32.mrf.mxu0
        %v1717 = vadd.f32 %v1592, %v1716
        %1718 = vmatmul.f32.gmra.mxu0 %v1617
        %v1719 = vpop.f32.mrf.mxu0
        %v1720 = vadd.f32 %v1592, %v1719
        %1721 = vdwg.mxu0
        %v1722 = vmax.f32 %v1699, 0.0
        %v1723 = vmax.f32 %v1702, 0.0
        %v1724 = vmax.f32 %v1705, 0.0
        %v1725 = vmax.f32 %v1708, 0.0
        %v1726 = vmax.f32 %v1711, 0.0
        %v1727 = vmax.f32 %v1714, 0.0
        %v1728 = vmax.f32 %v1717, 0.0
        %v1729 = vmax.f32 %v1720, 0.0
        %1738 = vrot.lane.b32.xlu0 %v1722, 4
        %v1739 = vpop.permute.xlu0 %1738
        %1740 = vrot.lane.b32.xlu0 %v1723, 4
        %v1741 = vpop.permute.xlu0 %1740
        %1742 = vrot.lane.b32.xlu0 %v1724, 4
        %v1743 = vpop.permute.xlu0 %1742
        %1744 = vrot.lane.b32.xlu0 %v1725, 4
        %v1745 = vpop.permute.xlu0 %1744
        %1746 = vrot.lane.b32.xlu0 %v1726, 4
        %v1747 = vpop.permute.xlu0 %1746
        %1748 = vrot.lane.b32.xlu0 %v1727, 4
        %v1749 = vpop.permute.xlu0 %1748
        %1750 = vrot.lane.b32.xlu0 %v1728, 4
        %v1751 = vpop.permute.xlu0 %1750
        %1752 = vrot.lane.b32.xlu0 %v1729, 4
        %v1753 = vpop.permute.xlu0 %1752
        %v1762 = vsel %vm314, %v1660, %v1739
        %v1763 = vsel %vm314, %v1661, %v1741
        %v1764 = vsel %vm314, %v1662, %v1743
        %v1765 = vsel %vm314, %v1663, %v1745
        %v1766 = vsel %vm314, %v1664, %v1747
        %v1767 = vsel %vm314, %v1665, %v1749
        %v1768 = vsel %vm314, %v1666, %v1751
        %v1769 = vsel %vm314, %v1667, %v1753
        %1770 = vst.msk [vmem:[%s259] sm:$0xff] %vm306, %v1762
        %1771 = vst.msk [vmem:[%s259 + $0x10] sm:$0xff] %vm306, %v1763
        %1772 = vst.msk [vmem:[%s259 + $0x20] sm:$0xff] %vm306, %v1764
        %1773 = vst.msk [vmem:[%s259 + $0x30] sm:$0xff] %vm306, %v1765
        %1774 = vst.msk [vmem:[%s259 + $0x40] sm:$0xff] %vm306, %v1766
        %1775 = vst.msk [vmem:[%s259 + $0x50] sm:$0xff] %vm306, %v1767
        %1776 = vst.msk [vmem:[%s259 + $0x60] sm:$0xff] %vm306, %v1768
        %1777 = vst.msk [vmem:[%s259 + $0x70] sm:$0xff] %vm306, %v1769
        %v1778 = vld [vmem:[%s712] sm:$0xff]
        %v1779 = vld [vmem:[%s712 + $0x20] sm:$0xff]
        %v1780 = vld [vmem:[%s712 + $0x40] sm:$0xff]
        %v1781 = vld [vmem:[%s712 + $0x60] sm:$0xff]
        %v1782 = vld [vmem:[%s712 + $0x80] sm:$0xff]
        %v1783 = vld [vmem:[%s712 + $0xa0] sm:$0xff]
        %v1784 = vld [vmem:[%s712 + $0xc0] sm:$0xff]
        %v1785 = vld [vmem:[%s712 + $0xe0] sm:$0xff]
        %v1786 = vld [vmem:[%s1071] sm:$0xff]
        %v1787 = vld [vmem:[%s1071 + $0x20] sm:$0xff]
        %v1788 = vld [vmem:[%s1071 + $0x40] sm:$0xff]
        %v1789 = vld [vmem:[%s1071 + $0x60] sm:$0xff]
        %v1790 = vld [vmem:[%s1071 + $0x80] sm:$0xff]
        %v1791 = vld [vmem:[%s1071 + $0xa0] sm:$0xff]
        %v1792 = vld [vmem:[%s1071 + $0xc0] sm:$0xff]
        %v1793 = vld [vmem:[%s1071 + $0xe0] sm:$0xff]
        %v1794 = vld [vmem:[%s712 + $0x1] sm:$0xff]
        %v1795 = vld [vmem:[%s712 + $0x21] sm:$0xff]
        %v1796 = vld [vmem:[%s712 + $0x41] sm:$0xff]
        %v1797 = vld [vmem:[%s712 + $0x61] sm:$0xff]
        %v1798 = vld [vmem:[%s712 + $0x81] sm:$0xff]
        %v1799 = vld [vmem:[%s712 + $0xa1] sm:$0xff]
        %v1800 = vld [vmem:[%s712 + $0xc1] sm:$0xff]
        %v1801 = vld [vmem:[%s712 + $0xe1] sm:$0xff]
        %v1802 = vld [vmem:[%s1071 + $0x1] sm:$0xff]
        %v1803 = vld [vmem:[%s1071 + $0x21] sm:$0xff]
        %v1804 = vld [vmem:[%s1071 + $0x41] sm:$0xff]
        %v1805 = vld [vmem:[%s1071 + $0x61] sm:$0xff]
        %v1806 = vld [vmem:[%s1071 + $0x81] sm:$0xff]
        %v1807 = vld [vmem:[%s1071 + $0xa1] sm:$0xff]
        %v1808 = vld [vmem:[%s1071 + $0xc1] sm:$0xff]
        %v1809 = vld [vmem:[%s1071 + $0xe1] sm:$0xff]
        %v1810 = vld [vmem:[%s1013] sm:$0xff]
        %v1811 = vld [vmem:[%s1013 + $0x20] sm:$0xff]
        %v1812 = vld [vmem:[%s1013 + $0x40] sm:$0xff]
        %v1813 = vld [vmem:[%s1013 + $0x60] sm:$0xff]
        %v1814 = vld [vmem:[%s1013 + $0x80] sm:$0xff]
        %v1815 = vld [vmem:[%s1013 + $0xa0] sm:$0xff]
        %v1816 = vld [vmem:[%s1013 + $0xc0] sm:$0xff]
        %v1817 = vld [vmem:[%s1013 + $0xe0] sm:$0xff]
        %v1818 = vld [vmem:[%s1104] sm:$0xff]
        %v1819 = vld [vmem:[%s1104 + $0x20] sm:$0xff]
        %v1820 = vld [vmem:[%s1104 + $0x40] sm:$0xff]
        %v1821 = vld [vmem:[%s1104 + $0x60] sm:$0xff]
        %v1822 = vld [vmem:[%s1104 + $0x80] sm:$0xff]
        %v1823 = vld [vmem:[%s1104 + $0xa0] sm:$0xff]
        %v1824 = vld [vmem:[%s1104 + $0xc0] sm:$0xff]
        %v1825 = vld [vmem:[%s1104 + $0xe0] sm:$0xff]
        %v1826 = vld [vmem:[%s1013 + $0x1] sm:$0xff]
        %v1827 = vld [vmem:[%s1013 + $0x21] sm:$0xff]
        %v1828 = vld [vmem:[%s1013 + $0x41] sm:$0xff]
        %v1829 = vld [vmem:[%s1013 + $0x61] sm:$0xff]
        %v1830 = vld [vmem:[%s1013 + $0x81] sm:$0xff]
        %v1831 = vld [vmem:[%s1013 + $0xa1] sm:$0xff]
        %v1832 = vld [vmem:[%s1013 + $0xc1] sm:$0xff]
        %v1833 = vld [vmem:[%s1013 + $0xe1] sm:$0xff]
        %v1834 = vld [vmem:[%s1104 + $0x1] sm:$0xff]
        %v1835 = vld [vmem:[%s1104 + $0x21] sm:$0xff]
        %v1836 = vld [vmem:[%s1104 + $0x41] sm:$0xff]
        %v1837 = vld [vmem:[%s1104 + $0x61] sm:$0xff]
        %v1838 = vld [vmem:[%s1104 + $0x81] sm:$0xff]
        %v1839 = vld [vmem:[%s1104 + $0xa1] sm:$0xff]
        %v1840 = vld [vmem:[%s1104 + $0xc1] sm:$0xff]
        %v1841 = vld [vmem:[%s1104 + $0xe1] sm:$0xff]
        %s1842 = scalar_lea.vmem [#allocation2], 48
        %v1843 = vld [vmem:[%s1842] sm:$0xff]
        %v1844 = vld [vmem:[%s1842 + $0x20] sm:$0xff]
        %v1845 = vld [vmem:[%s1842 + $0x40] sm:$0xff]
        %v1846 = vld [vmem:[%s1842 + $0x60] sm:$0xff]
        %v1847 = vld [vmem:[%s1842 + $0x80] sm:$0xff]
        %v1848 = vld [vmem:[%s1842 + $0xa0] sm:$0xff]
        %v1849 = vld [vmem:[%s1842 + $0xc0] sm:$0xff]
        %v1850 = vld [vmem:[%s1842 + $0xe0] sm:$0xff]
        %s1851 = scalar_lea.vmem %s269, 48
        %v1852 = vld [vmem:[%s1851] sm:$0xff]
        %v1853 = vld [vmem:[%s1851 + $0x20] sm:$0xff]
        %v1854 = vld [vmem:[%s1851 + $0x40] sm:$0xff]
        %v1855 = vld [vmem:[%s1851 + $0x60] sm:$0xff]
        %v1856 = vld [vmem:[%s1851 + $0x80] sm:$0xff]
        %v1857 = vld [vmem:[%s1851 + $0xa0] sm:$0xff]
        %v1858 = vld [vmem:[%s1851 + $0xc0] sm:$0xff]
        %v1859 = vld [vmem:[%s1851 + $0xe0] sm:$0xff]
        %v1860 = vld [vmem:[%s1842 + $0x1] sm:$0xff]
        %v1861 = vld [vmem:[%s1842 + $0x21] sm:$0xff]
        %v1862 = vld [vmem:[%s1842 + $0x41] sm:$0xff]
        %v1863 = vld [vmem:[%s1842 + $0x61] sm:$0xff]
        %v1864 = vld [vmem:[%s1842 + $0x81] sm:$0xff]
        %v1865 = vld [vmem:[%s1842 + $0xa1] sm:$0xff]
        %v1866 = vld [vmem:[%s1842 + $0xc1] sm:$0xff]
        %v1867 = vld [vmem:[%s1842 + $0xe1] sm:$0xff]
        %v1868 = vld [vmem:[%s1851 + $0x1] sm:$0xff]
        %v1869 = vld [vmem:[%s1851 + $0x21] sm:$0xff]
        %v1870 = vld [vmem:[%s1851 + $0x41] sm:$0xff]
        %v1871 = vld [vmem:[%s1851 + $0x61] sm:$0xff]
        %v1872 = vld [vmem:[%s1851 + $0x81] sm:$0xff]
        %v1873 = vld [vmem:[%s1851 + $0xa1] sm:$0xff]
        %v1874 = vld [vmem:[%s1851 + $0xc1] sm:$0xff]
        %v1875 = vld [vmem:[%s1851 + $0xe1] sm:$0xff]
        %1884 = vrot.lane.b32.xlu0 %v1794, 8
        %v1885 = vpop.permute.xlu0 %1884
        %1886 = vrot.lane.b32.xlu0 %v1795, 8
        %v1887 = vpop.permute.xlu0 %1886
        %1888 = vrot.lane.b32.xlu0 %v1796, 8
        %v1889 = vpop.permute.xlu0 %1888
        %1890 = vrot.lane.b32.xlu0 %v1797, 8
        %v1891 = vpop.permute.xlu0 %1890
        %1892 = vrot.lane.b32.xlu0 %v1798, 8
        %v1893 = vpop.permute.xlu0 %1892
        %1894 = vrot.lane.b32.xlu0 %v1799, 8
        %v1895 = vpop.permute.xlu0 %1894
        %1896 = vrot.lane.b32.xlu0 %v1800, 8
        %v1897 = vpop.permute.xlu0 %1896
        %1898 = vrot.lane.b32.xlu0 %v1801, 8
        %v1899 = vpop.permute.xlu0 %1898
        %1916 = vrot.lane.b32.xlu0 %v1810, 16
        %v1917 = vpop.permute.xlu0 %1916
        %1918 = vrot.lane.b32.xlu0 %v1811, 16
        %v1919 = vpop.permute.xlu0 %1918
        %1920 = vrot.lane.b32.xlu0 %v1812, 16
        %v1921 = vpop.permute.xlu0 %1920
        %1922 = vrot.lane.b32.xlu0 %v1813, 16
        %v1923 = vpop.permute.xlu0 %1922
        %1924 = vrot.lane.b32.xlu0 %v1814, 16
        %v1925 = vpop.permute.xlu0 %1924
        %1926 = vrot.lane.b32.xlu0 %v1815, 16
        %v1927 = vpop.permute.xlu0 %1926
        %1928 = vrot.lane.b32.xlu0 %v1816, 16
        %v1929 = vpop.permute.xlu0 %1928
        %1930 = vrot.lane.b32.xlu0 %v1817, 16
        %v1931 = vpop.permute.xlu0 %1930
        %1948 = vrot.lane.b32.xlu0 %v1826, 24
        %v1949 = vpop.permute.xlu0 %1948
        %1950 = vrot.lane.b32.xlu0 %v1827, 24
        %v1951 = vpop.permute.xlu0 %1950
        %1952 = vrot.lane.b32.xlu0 %v1828, 24
        %v1953 = vpop.permute.xlu0 %1952
        %1954 = vrot.lane.b32.xlu0 %v1829, 24
        %v1955 = vpop.permute.xlu0 %1954
        %1956 = vrot.lane.b32.xlu0 %v1830, 24
        %v1957 = vpop.permute.xlu0 %1956
        %1958 = vrot.lane.b32.xlu0 %v1831, 24
        %v1959 = vpop.permute.xlu0 %1958
        %1960 = vrot.lane.b32.xlu0 %v1832, 24
        %v1961 = vpop.permute.xlu0 %1960
        %1962 = vrot.lane.b32.xlu0 %v1833, 24
        %v1963 = vpop.permute.xlu0 %1962
        %1980 = vrot.lane.b32.xlu0 %v1843, 32
        %v1981 = vpop.permute.xlu0 %1980
        %1982 = vrot.lane.b32.xlu0 %v1844, 32
        %v1983 = vpop.permute.xlu0 %1982
        %1984 = vrot.lane.b32.xlu0 %v1845, 32
        %v1985 = vpop.permute.xlu0 %1984
        %1986 = vrot.lane.b32.xlu0 %v1846, 32
        %v1987 = vpop.permute.xlu0 %1986
        %1988 = vrot.lane.b32.xlu0 %v1847, 32
        %v1989 = vpop.permute.xlu0 %1988
        %1990 = vrot.lane.b32.xlu0 %v1848, 32
        %v1991 = vpop.permute.xlu0 %1990
        %1992 = vrot.lane.b32.xlu0 %v1849, 32
        %v1993 = vpop.permute.xlu0 %1992
        %1994 = vrot.lane.b32.xlu0 %v1850, 32
        %v1995 = vpop.permute.xlu0 %1994
        %2012 = vrot.lane.b32.xlu0 %v1860, 40
        %v2013 = vpop.permute.xlu0 %2012
        %2014 = vrot.lane.b32.xlu0 %v1861, 40
        %v2015 = vpop.permute.xlu0 %2014
        %2016 = vrot.lane.b32.xlu0 %v1862, 40
        %v2017 = vpop.permute.xlu0 %2016
        %2018 = vrot.lane.b32.xlu0 %v1863, 40
        %v2019 = vpop.permute.xlu0 %2018
        %2020 = vrot.lane.b32.xlu0 %v1864, 40
        %v2021 = vpop.permute.xlu0 %2020
        %2022 = vrot.lane.b32.xlu0 %v1865, 40
        %v2023 = vpop.permute.xlu0 %2022
        %2024 = vrot.lane.b32.xlu0 %v1866, 40
        %v2025 = vpop.permute.xlu0 %2024
        %2026 = vrot.lane.b32.xlu0 %v1867, 40
        %v2027 = vpop.permute.xlu0 %2026
        %2044 = vrot.lane.b32.xlu0 %v1786, 48
        %v2045 = vpop.permute.xlu0 %2044
        %2046 = vrot.lane.b32.xlu0 %v1787, 48
        %v2047 = vpop.permute.xlu0 %2046
        %2048 = vrot.lane.b32.xlu0 %v1788, 48
        %v2049 = vpop.permute.xlu0 %2048
        %2050 = vrot.lane.b32.xlu0 %v1789, 48
        %v2051 = vpop.permute.xlu0 %2050
        %2052 = vrot.lane.b32.xlu0 %v1790, 48
        %v2053 = vpop.permute.xlu0 %2052
        %2054 = vrot.lane.b32.xlu0 %v1791, 48
        %v2055 = vpop.permute.xlu0 %2054
        %2056 = vrot.lane.b32.xlu0 %v1792, 48
        %v2057 = vpop.permute.xlu0 %2056
        %2058 = vrot.lane.b32.xlu0 %v1793, 48
        %v2059 = vpop.permute.xlu0 %2058
        %2076 = vrot.lane.b32.xlu0 %v1802, 56
        %v2077 = vpop.permute.xlu0 %2076
        %2078 = vrot.lane.b32.xlu0 %v1803, 56
        %v2079 = vpop.permute.xlu0 %2078
        %2080 = vrot.lane.b32.xlu0 %v1804, 56
        %v2081 = vpop.permute.xlu0 %2080
        %2082 = vrot.lane.b32.xlu0 %v1805, 56
        %v2083 = vpop.permute.xlu0 %2082
        %2084 = vrot.lane.b32.xlu0 %v1806, 56
        %v2085 = vpop.permute.xlu0 %2084
        %2086 = vrot.lane.b32.xlu0 %v1807, 56
        %v2087 = vpop.permute.xlu0 %2086
        %2088 = vrot.lane.b32.xlu0 %v1808, 56
        %v2089 = vpop.permute.xlu0 %2088
        %2090 = vrot.lane.b32.xlu0 %v1809, 56
        %v2091 = vpop.permute.xlu0 %2090
        %2108 = vrot.lane.b32.xlu0 %v1818, 64
        %v2109 = vpop.permute.xlu0 %2108
        %2110 = vrot.lane.b32.xlu0 %v1819, 64
        %v2111 = vpop.permute.xlu0 %2110
        %2112 = vrot.lane.b32.xlu0 %v1820, 64
        %v2113 = vpop.permute.xlu0 %2112
        %2114 = vrot.lane.b32.xlu0 %v1821, 64
        %v2115 = vpop.permute.xlu0 %2114
        %2116 = vrot.lane.b32.xlu0 %v1822, 64
        %v2117 = vpop.permute.xlu0 %2116
        %2118 = vrot.lane.b32.xlu0 %v1823, 64
        %v2119 = vpop.permute.xlu0 %2118
        %2120 = vrot.lane.b32.xlu0 %v1824, 64
        %v2121 = vpop.permute.xlu0 %2120
        %2122 = vrot.lane.b32.xlu0 %v1825, 64
        %v2123 = vpop.permute.xlu0 %2122
        %2140 = vrot.lane.b32.xlu0 %v1834, 72
        %v2141 = vpop.permute.xlu0 %2140
        %2142 = vrot.lane.b32.xlu0 %v1835, 72
        %v2143 = vpop.permute.xlu0 %2142
        %2144 = vrot.lane.b32.xlu0 %v1836, 72
        %v2145 = vpop.permute.xlu0 %2144
        %2146 = vrot.lane.b32.xlu0 %v1837, 72
        %v2147 = vpop.permute.xlu0 %2146
        %2148 = vrot.lane.b32.xlu0 %v1838, 72
        %v2149 = vpop.permute.xlu0 %2148
        %2150 = vrot.lane.b32.xlu0 %v1839, 72
        %v2151 = vpop.permute.xlu0 %2150
        %2152 = vrot.lane.b32.xlu0 %v1840, 72
        %v2153 = vpop.permute.xlu0 %2152
        %2154 = vrot.lane.b32.xlu0 %v1841, 72
        %v2155 = vpop.permute.xlu0 %2154
        %2172 = vrot.lane.b32.xlu0 %v1852, 80
        %v2173 = vpop.permute.xlu0 %2172
        %2174 = vrot.lane.b32.xlu0 %v1853, 80
        %v2175 = vpop.permute.xlu0 %2174
        %2176 = vrot.lane.b32.xlu0 %v1854, 80
        %v2177 = vpop.permute.xlu0 %2176
        %2178 = vrot.lane.b32.xlu0 %v1855, 80
        %v2179 = vpop.permute.xlu0 %2178
        %2180 = vrot.lane.b32.xlu0 %v1856, 80
        %v2181 = vpop.permute.xlu0 %2180
        %2182 = vrot.lane.b32.xlu0 %v1857, 80
        %v2183 = vpop.permute.xlu0 %2182
        %2184 = vrot.lane.b32.xlu0 %v1858, 80
        %v2185 = vpop.permute.xlu0 %2184
        %2186 = vrot.lane.b32.xlu0 %v1859, 80
        %v2187 = vpop.permute.xlu0 %2186
        %2204 = vrot.lane.b32.xlu0 %v1868, 88
        %v2205 = vpop.permute.xlu0 %2204
        %2206 = vrot.lane.b32.xlu0 %v1869, 88
        %v2207 = vpop.permute.xlu0 %2206
        %2208 = vrot.lane.b32.xlu0 %v1870, 88
        %v2209 = vpop.permute.xlu0 %2208
        %2210 = vrot.lane.b32.xlu0 %v1871, 88
        %v2211 = vpop.permute.xlu0 %2210
        %2212 = vrot.lane.b32.xlu0 %v1872, 88
        %v2213 = vpop.permute.xlu0 %2212
        %2214 = vrot.lane.b32.xlu0 %v1873, 88
        %v2215 = vpop.permute.xlu0 %2214
        %2216 = vrot.lane.b32.xlu0 %v1874, 88
        %v2217 = vpop.permute.xlu0 %2216
        %2218 = vrot.lane.b32.xlu0 %v1875, 88
        %v2219 = vpop.permute.xlu0 %2218
        %v2228 = vsel %vm306, %v1778, %v1885
        %v2229 = vsel %vm306, %v1779, %v1887
        %v2230 = vsel %vm306, %v1780, %v1889
        %v2231 = vsel %vm306, %v1781, %v1891
        %v2232 = vsel %vm306, %v1782, %v1893
        %v2233 = vsel %vm306, %v1783, %v1895
        %v2234 = vsel %vm306, %v1784, %v1897
        %v2235 = vsel %vm306, %v1785, %v1899
        %v2236 = vsel %vm1489, %v2228, %v1917
        %v2237 = vsel %vm1489, %v2229, %v1919
        %v2238 = vsel %vm1489, %v2230, %v1921
        %v2239 = vsel %vm1489, %v2231, %v1923
        %v2240 = vsel %vm1489, %v2232, %v1925
        %v2241 = vsel %vm1489, %v2233, %v1927
        %v2242 = vsel %vm1489, %v2234, %v1929
        %v2243 = vsel %vm1489, %v2235, %v1931
        %v2244 = vsel %vm1498, %v2236, %v1949
        %v2245 = vsel %vm1498, %v2237, %v1951
        %v2246 = vsel %vm1498, %v2238, %v1953
        %v2247 = vsel %vm1498, %v2239, %v1955
        %v2248 = vsel %vm1498, %v2240, %v1957
        %v2249 = vsel %vm1498, %v2241, %v1959
        %v2250 = vsel %vm1498, %v2242, %v1961
        %v2251 = vsel %vm1498, %v2243, %v1963
        %v2252 = vsel %vm1507, %v2244, %v1981
        %v2253 = vsel %vm1507, %v2245, %v1983
        %v2254 = vsel %vm1507, %v2246, %v1985
        %v2255 = vsel %vm1507, %v2247, %v1987
        %v2256 = vsel %vm1507, %v2248, %v1989
        %v2257 = vsel %vm1507, %v2249, %v1991
        %v2258 = vsel %vm1507, %v2250, %v1993
        %v2259 = vsel %vm1507, %v2251, %v1995
        %v2260 = vsel %vm1516, %v2252, %v2013
        %v2261 = vsel %vm1516, %v2253, %v2015
        %v2262 = vsel %vm1516, %v2254, %v2017
        %v2263 = vsel %vm1516, %v2255, %v2019
        %v2264 = vsel %vm1516, %v2256, %v2021
        %v2265 = vsel %vm1516, %v2257, %v2023
        %v2266 = vsel %vm1516, %v2258, %v2025
        %v2267 = vsel %vm1516, %v2259, %v2027
        %v2268 = vsel %vm1525, %v2260, %v2045
        %v2269 = vsel %vm1525, %v2261, %v2047
        %v2270 = vsel %vm1525, %v2262, %v2049
        %v2271 = vsel %vm1525, %v2263, %v2051
        %v2272 = vsel %vm1525, %v2264, %v2053
        %v2273 = vsel %vm1525, %v2265, %v2055
        %v2274 = vsel %vm1525, %v2266, %v2057
        %v2275 = vsel %vm1525, %v2267, %v2059
        %v2276 = vsel %vm1534, %v2268, %v2077
        %v2277 = vsel %vm1534, %v2269, %v2079
        %v2278 = vsel %vm1534, %v2270, %v2081
        %v2279 = vsel %vm1534, %v2271, %v2083
        %v2280 = vsel %vm1534, %v2272, %v2085
        %v2281 = vsel %vm1534, %v2273, %v2087
        %v2282 = vsel %vm1534, %v2274, %v2089
        %v2283 = vsel %vm1534, %v2275, %v2091
        %v2284 = vsel %vm1543, %v2276, %v2109
        %v2285 = vsel %vm1543, %v2277, %v2111
        %v2286 = vsel %vm1543, %v2278, %v2113
        %v2287 = vsel %vm1543, %v2279, %v2115
        %v2288 = vsel %vm1543, %v2280, %v2117
        %v2289 = vsel %vm1543, %v2281, %v2119
        %v2290 = vsel %vm1543, %v2282, %v2121
        %v2291 = vsel %vm1543, %v2283, %v2123
        %v2292 = vsel %vm1552, %v2284, %v2141
        %v2293 = vsel %vm1552, %v2285, %v2143
        %v2294 = vsel %vm1552, %v2286, %v2145
        %v2295 = vsel %vm1552, %v2287, %v2147
        %v2296 = vsel %vm1552, %v2288, %v2149
        %v2297 = vsel %vm1552, %v2289, %v2151
        %v2298 = vsel %vm1552, %v2290, %v2153
        %v2299 = vsel %vm1552, %v2291, %v2155
        %v2300 = vsel %vm1561, %v2292, %v2173
        %v2301 = vsel %vm1561, %v2293, %v2175
        %v2302 = vsel %vm1561, %v2294, %v2177
        %v2303 = vsel %vm1561, %v2295, %v2179
        %v2304 = vsel %vm1561, %v2296, %v2181
        %v2305 = vsel %vm1561, %v2297, %v2183
        %v2306 = vsel %vm1561, %v2298, %v2185
        %v2307 = vsel %vm1561, %v2299, %v2187
        %v2308 = vsel %vm1570, %v2300, %v2205
        %v2309 = vsel %vm1570, %v2301, %v2207
        %v2310 = vsel %vm1570, %v2302, %v2209
        %v2311 = vsel %vm1570, %v2303, %v2211
        %v2312 = vsel %vm1570, %v2304, %v2213
        %v2313 = vsel %vm1570, %v2305, %v2215
        %v2314 = vsel %vm1570, %v2306, %v2217
        %v2315 = vsel %vm1570, %v2307, %v2219
        %v2316 = vld [vmem:[%s4] sm:$0xff]
        %v2317 = vld [vmem:[%s4 + $0x8] sm:$0xff]
        %v2318 = vld [vmem:[%s4 + $0x10] sm:$0xff]
        %v2319 = vld [vmem:[%s4 + $0x18] sm:$0xff]
        %v2320 = vld [vmem:[%s4 + $0x20] sm:$0xff]
        %v2321 = vld [vmem:[%s4 + $0x28] sm:$0xff]
        %v2322 = vld [vmem:[%s4 + $0x30] sm:$0xff]
        %v2323 = vld [vmem:[%s4 + $0x38] sm:$0xff]
        %v2324 = vld [vmem:[%s4 + $0x40] sm:$0xff]
        %v2325 = vld [vmem:[%s4 + $0x48] sm:$0xff]
        %v2326 = vld [vmem:[%s4 + $0x50] sm:$0xff]
        %v2327 = vld [vmem:[%s4 + $0x58] sm:$0xff]
        %v2329 = vsel %vm1594, %v2308, 0
        %v2332 = vsel %vm1594, %v2309, 0
        %v2335 = vsel %vm1594, %v2310, 0
        %v2338 = vsel %vm1594, %v2311, 0
        %v2341 = vsel %vm1594, %v2312, 0
        %v2344 = vsel %vm1594, %v2313, 0
        %v2347 = vsel %vm1594, %v2314, 0
        %v2350 = vsel %vm1594, %v2315, 0
        %2352 = vmatpush.msra.mxu0 0.0
        %2353 = vmatpush.msra.mxu0 0.0
        %2354 = vmatpush.msra.mxu0 0.0
        %2355 = vmatpush.msra.mxu0 0.0
        %2356 = vmatpush.msra.mxu0 %v2327
        %2357 = vmatpush.msra.mxu0 %v2326
        %2358 = vmatpush.msra.mxu0 %v2325
        %2359 = vmatpush.msra.mxu0 %v2324
        %2360 = vmatpush.msra.mxu0 %v2323
        %2361 = vmatpush.msra.mxu0 %v2322
        %2362 = vmatpush.msra.mxu0 %v2321
        %2363 = vmatpush.msra.mxu0 %v2320
        %2364 = vmatpush.msra.mxu0 %v2319
        %2365 = vmatpush.msra.mxu0 %v2318
        %2366 = vmatpush.msra.mxu0 %v2317
        %2367 = vmatpush.msra.mxu0 %v2316
        %2368 = vmatmul.f32.gmra.mxu0 %v2329
        %v2369 = vpop.f32.mrf.mxu0
        %v2370 = vadd.f32 %v1592, %v2369
        %2371 = vmatmul.f32.gmra.mxu0 %v2332
        %v2372 = vpop.f32.mrf.mxu0
        %v2373 = vadd.f32 %v1592, %v2372
        %2374 = vmatmul.f32.gmra.mxu0 %v2335
        %v2375 = vpop.f32.mrf.mxu0
        %v2376 = vadd.f32 %v1592, %v2375
        %2377 = vmatmul.f32.gmra.mxu0 %v2338
        %v2378 = vpop.f32.mrf.mxu0
        %v2379 = vadd.f32 %v1592, %v2378
        %2380 = vmatmul.f32.gmra.mxu0 %v2341
        %v2381 = vpop.f32.mrf.mxu0
        %v2382 = vadd.f32 %v1592, %v2381
        %2383 = vmatmul.f32.gmra.mxu0 %v2344
        %v2384 = vpop.f32.mrf.mxu0
        %v2385 = vadd.f32 %v1592, %v2384
        %2386 = vmatmul.f32.gmra.mxu0 %v2347
        %v2387 = vpop.f32.mrf.mxu0
        %v2388 = vadd.f32 %v1592, %v2387
        %2389 = vmatmul.f32.gmra.mxu0 %v2350
        %v2390 = vpop.f32.mrf.mxu0
        %v2391 = vadd.f32 %v1592, %v2390
        %2392 = vdwg.mxu0
        %v2393 = vmax.f32 %v2370, 0.0
        %v2394 = vmax.f32 %v2373, 0.0
        %v2395 = vmax.f32 %v2376, 0.0
        %v2396 = vmax.f32 %v2379, 0.0
        %v2397 = vmax.f32 %v2382, 0.0
        %v2398 = vmax.f32 %v2385, 0.0
        %v2399 = vmax.f32 %v2388, 0.0
        %v2400 = vmax.f32 %v2391, 0.0
        %v2401 = vld [vmem:[%s1668] sm:$0xff]
        %v2402 = vld [vmem:[%s1668 + $0x8] sm:$0xff]
        %v2403 = vld [vmem:[%s1668 + $0x10] sm:$0xff]
        %v2404 = vld [vmem:[%s1668 + $0x18] sm:$0xff]
        %v2405 = vld [vmem:[%s1668 + $0x20] sm:$0xff]
        %v2406 = vld [vmem:[%s1668 + $0x28] sm:$0xff]
        %v2407 = vld [vmem:[%s1668 + $0x30] sm:$0xff]
        %v2408 = vld [vmem:[%s1668 + $0x38] sm:$0xff]
        %v2409 = vld [vmem:[%s1668 + $0x40] sm:$0xff]
        %v2410 = vld [vmem:[%s1668 + $0x48] sm:$0xff]
        %v2411 = vld [vmem:[%s1668 + $0x50] sm:$0xff]
        %v2412 = vld [vmem:[%s1668 + $0x58] sm:$0xff]
        %2413 = vmatpush.msra.mxu0 0.0
        %2414 = vmatpush.msra.mxu0 0.0
        %2415 = vmatpush.msra.mxu0 0.0
        %2416 = vmatpush.msra.mxu0 0.0
        %2417 = vmatpush.msra.mxu0 %v2412
        %2418 = vmatpush.msra.mxu0 %v2411
        %2419 = vmatpush.msra.mxu0 %v2410
        %2420 = vmatpush.msra.mxu0 %v2409
        %2421 = vmatpush.msra.mxu0 %v2408
        %2422 = vmatpush.msra.mxu0 %v2407
        %2423 = vmatpush.msra.mxu0 %v2406
        %2424 = vmatpush.msra.mxu0 %v2405
        %2425 = vmatpush.msra.mxu0 %v2404
        %2426 = vmatpush.msra.mxu0 %v2403
        %2427 = vmatpush.msra.mxu0 %v2402
        %2428 = vmatpush.msra.mxu0 %v2401
        %2429 = vmatmul.f32.gmra.mxu0 %v2329
        %v2430 = vpop.f32.mrf.mxu0
        %v2431 = vadd.f32 %v1592, %v2430
        %2432 = vmatmul.f32.gmra.mxu0 %v2332
        %v2433 = vpop.f32.mrf.mxu0
        %v2434 = vadd.f32 %v1592, %v2433
        %2435 = vmatmul.f32.gmra.mxu0 %v2335
        %v2436 = vpop.f32.mrf.mxu0
        %v2437 = vadd.f32 %v1592, %v2436
        %2438 = vmatmul.f32.gmra.mxu0 %v2338
        %v2439 = vpop.f32.mrf.mxu0
        %v2440 = vadd.f32 %v1592, %v2439
        %2441 = vmatmul.f32.gmra.mxu0 %v2341
        %v2442 = vpop.f32.mrf.mxu0
        %v2443 = vadd.f32 %v1592, %v2442
        %2444 = vmatmul.f32.gmra.mxu0 %v2344
        %v2445 = vpop.f32.mrf.mxu0
        %v2446 = vadd.f32 %v1592, %v2445
        %2447 = vmatmul.f32.gmra.mxu0 %v2347
        %v2448 = vpop.f32.mrf.mxu0
        %v2449 = vadd.f32 %v1592, %v2448
        %2450 = vmatmul.f32.gmra.mxu0 %v2350
        %v2451 = vpop.f32.mrf.mxu0
        %v2452 = vadd.f32 %v1592, %v2451
        %2453 = vdwg.mxu0
        %v2454 = vmax.f32 %v2431, 0.0
        %v2455 = vmax.f32 %v2434, 0.0
        %v2456 = vmax.f32 %v2437, 0.0
        %v2457 = vmax.f32 %v2440, 0.0
        %v2458 = vmax.f32 %v2443, 0.0
        %v2459 = vmax.f32 %v2446, 0.0
        %v2460 = vmax.f32 %v2449, 0.0
        %v2461 = vmax.f32 %v2452, 0.0
        %2470 = vrot.lane.b32.xlu0 %v2454, 4
        %v2471 = vpop.permute.xlu0 %2470
        %2472 = vrot.lane.b32.xlu0 %v2455, 4
        %v2473 = vpop.permute.xlu0 %2472
        %2474 = vrot.lane.b32.xlu0 %v2456, 4
        %v2475 = vpop.permute.xlu0 %2474
        %2476 = vrot.lane.b32.xlu0 %v2457, 4
        %v2477 = vpop.permute.xlu0 %2476
        %2478 = vrot.lane.b32.xlu0 %v2458, 4
        %v2479 = vpop.permute.xlu0 %2478
        %2480 = vrot.lane.b32.xlu0 %v2459, 4
        %v2481 = vpop.permute.xlu0 %2480
        %2482 = vrot.lane.b32.xlu0 %v2460, 4
        %v2483 = vpop.permute.xlu0 %2482
        %2484 = vrot.lane.b32.xlu0 %v2461, 4
        %v2485 = vpop.permute.xlu0 %2484
        %v2494 = vsel %vm314, %v2393, %v2471
        %v2495 = vsel %vm314, %v2394, %v2473
        %v2496 = vsel %vm314, %v2395, %v2475
        %v2497 = vsel %vm314, %v2396, %v2477
        %v2498 = vsel %vm314, %v2397, %v2479
        %v2499 = vsel %vm314, %v2398, %v2481
        %v2500 = vsel %vm314, %v2399, %v2483
        %v2501 = vsel %vm314, %v2400, %v2485
        %s2502 = scalar_lea.vmem %s259, 8 [#allocation3]
        %2503 = vst.msk [vmem:[%s2502] sm:$0xff] %vm306, %v2494
        %2504 = vst.msk [vmem:[%s2502 + $0x10] sm:$0xff] %vm306, %v2495
        %2505 = vst.msk [vmem:[%s2502 + $0x20] sm:$0xff] %vm306, %v2496
        %2506 = vst.msk [vmem:[%s2502 + $0x30] sm:$0xff] %vm306, %v2497
        %2507 = vst.msk [vmem:[%s2502 + $0x40] sm:$0xff] %vm306, %v2498
        %2508 = vst.msk [vmem:[%s2502 + $0x50] sm:$0xff] %vm306, %v2499
        %2509 = vst.msk [vmem:[%s2502 + $0x60] sm:$0xff] %vm306, %v2500
        %2510 = vst.msk [vmem:[%s2502 + $0x70] sm:$0xff] %vm306, %v2501
        %s2511 = sand.u32 %s164, 1
        %s2512 = scalar_lea.sflag [#allocation4], %s2511
        %s2513 = sand.u32 %s164, 1
        %s2514 = smul.addr %s2513, 128
        %s2515 = scalar_lea.vmem [#allocation3], %s2514
        // Predicated region
        $region45: #{tpu_custom_call.1} parent=43 // pred_check
          %p2516 = pneg %p174
        $region46: #{tpu_custom_call.1} parent=43 // pred_check_branch
          %2518 = sbr.rel (%p2516) target = $region48
        $region47: #{tpu_custom_call.1} parent=43 // pred_region
          %2520 = vsyncadd %s2512, 0
          %s2521 = smul.addr %s20, 16
          %s2522 = smul.addr %s2521, 8
          %s2523 = scalar_lea.hbm %s6, %s2522
          %s2524 = sshll.u32 %s2515, 4
          %s2525 = int_to_ptr.vmem [resolvable:$true] %s2524
          %s2526 = sshll.u32 %s2523, 4
          %s2527 = int_to_ptr.hbm [resolvable:$true] %s2526
          %2532 = dma.vmem_to_hbm [thread:$0]  %s2525, 2048, %s2527, %s2512, 128, 128, 8
        $region48: #{tpu_custom_call.1} parent=43 // pred_fallthru
          _
      $region44: #{tpu_custom_call.1} parent=5 // pred_fallthru
        _
      %p2533 = scmp.le.s32.totalorder 2, %s15
      // Predicated region
      $region49: #{tpu_custom_call.1} parent=5 // pred_check
        %p2534 = pneg %p2533
      $region50: #{tpu_custom_call.1} parent=5 // pred_check_branch
        %2536 = sbr.rel (%p2534) target = $region52
      $region51: #{tpu_custom_call.1} parent=5 // pred_region
        %s2537 = ssub.s32 %s15, 2
        // Predicated region
        $region53: #{tpu_custom_call.1} parent=51 // pred_check
          %p2538 = pneg %p180
        $region54: #{tpu_custom_call.1} parent=51 // pred_check_branch
          %2540 = sbr.rel (%p2538) target = $region56
        $region55: #{tpu_custom_call.1} parent=51 // pred_region
          %s2541 = sand.u32 %s165, 1
          %s2542 = scalar_lea.sflag [#allocation4], %s2541
          %s2543 = sand.u32 %s165, 1
          %s2544 = smul.addr %s2543, 128
          %s2545 = scalar_lea.vmem [#allocation3], %s2544
          %2547 = dma.done %s2542, 2048
        $region56: #{tpu_custom_call.1} parent=51 // pred_fallthru
          _
      $region52: #{tpu_custom_call.1} parent=5 // pred_fallthru
        _
    $region6: #{tpu_custom_call.1} parent=1 // loop_footer
      %s19 = sadd.s32 1, %s15
    $region7: #{tpu_custom_call.1} parent=1 // loop_footer_branch
      %14 = sbr.rel target = $region3
    $region8: #{tpu_custom_call.1} parent=1 // loop_exit
      _
    %2548 = vsyncpa [#allocation4], 1
    %s2549 = scalar_lea.sflag [#allocation4], 1
    %2550 = vsyncpa %s2549, 1

</llo_original>
